<compile_context>
chip_gen: v7x
topology: tpu7x:2x2x1
jax: 0.10.0
libtpu: 0.0.40
codegen_flags: <defaults>
</compile_context>

<pallas_src>
import functools
import math

import jax
import jax.numpy as jnp
from jax.experimental import pallas as pl
from jax.experimental.pallas import tpu as pltpu

# ModelArgs(d_model=32, n_layer=1, vocab_size=..., d_state=16, expand=2, d_conv=4)
D_MODEL = 32
EXPAND = 2
D_INNER = EXPAND * D_MODEL           # 64
D_STATE = 16
D_CONV = 4
DT_RANK = math.ceil(D_MODEL / 16)    # 2
BATCH = 2
SEQLEN = 8

_SLAB_VEC_ROWS = 8                   # conv_w(4) + conv_b(1) + b_dt(1) + D(1) + pad(1)


def _mxu(a, b):
    # rhs (weights) are pre-cast to bf16 in the wrapper; lhs is cast here if it
    # was computed in f32 inside the kernel. f32 accumulation on the MXU.
    return jnp.dot(a.astype(jnp.bfloat16), b, preferred_element_type=jnp.float32)


def mamba_block_kernel(x_ref, w_in_ref, w_big_ref, slab_ref, out_ref,
                       *, seq_len, d_conv):
    bl = x_ref.shape[0]
    l = seq_len
    bsz = bl // l
    d_inner = w_in_ref.shape[1] // 2
    n = slab_ref.shape[0] - _SLAB_VEC_ROWS
    d_model = out_ref.shape[1]

    # ---- in_proj: one lane-dense (B*L, 2*d_inner) matmul, split x / res ----
    xr = _mxu(x_ref[...], w_in_ref[...])                  # (B*L, 2*d_inner) f32
    xz = xr[:, :d_inner]                                  # conv branch
    res = xr[:, d_inner:]                                 # gate branch

    # ---- causal depthwise conv1d (left pad d_conv-1, crop to L) ----
    # Tap k needs the input shifted down by s = d_conv-1-k rows per batch.
    # Rows are batch-major (r = b*L + t): roll the full 128-lane tile along the
    # sublane axis (XLU) and zero rows whose within-batch index t = r % L < s.
    conv_w = slab_ref[0:d_conv, :d_inner]                 # (d_conv, d_inner)
    conv_b = slab_ref[d_conv:d_conv + 1, :d_inner]        # (1, d_inner)
    t_idx = jax.lax.broadcasted_iota(jnp.int32, (bl, d_inner), 0) % l
    acc = xz * conv_w[d_conv - 1:d_conv]                  # tap with zero shift
    for k in range(d_conv - 1):
        s = d_conv - 1 - k
        shifted = pltpu.roll(xr, shift=s, axis=0)[:, :d_inner]
        shifted = jnp.where(t_idx >= s, shifted, 0.0)
        acc = acc + shifted * conv_w[k:k + 1]
    acc = acc + conv_b
    xc = acc * jax.nn.sigmoid(acc)                        # SiLU, (B*L, d_inner) f32

    # ---- fused x_proj / dt_proj / out_proj weight block: one matmul ----
    # cols [0:d_inner]=dt, [d_inner:d_inner+n]=B, [+n:+2n]=C, [+2n:+2n+d_model]=out_proj
    proj = _mxu(xc, w_big_ref[...])                       # (B*L, 128) f32
    dt = proj[:, :d_inner] + slab_ref[d_conv + 1:d_conv + 2, :d_inner]
    # softplus: exp(dt) overflows to inf on the dt>20 branch but is selected
    # away by the where (benign by construction; do not "fix" into a NaN path).
    delta = jnp.where(dt > 20.0, dt, jnp.log1p(jnp.exp(dt)))
    b_flat = proj[:, d_inner:d_inner + n]                 # (B*L, n)
    c_flat = proj[:, d_inner + n:d_inner + 2 * n]         # (B*L, n)

    # ---- fold batch into lanes: (B*L, d_inner) -> (L, B*d_inner) = (8, 128) ----
    def fold(a):
        return jnp.concatenate(
            [a[bb * l:(bb + 1) * l, :] for bb in range(bsz)], axis=1)

    delta_bd = fold(delta)                                # (L, B*d_inner)
    ud_bd = fold(delta * xc)                              # (L, B*d_inner)
    a_bd = -jnp.exp(slab_ref[_SLAB_VEC_ROWS:, :])         # (n, B*d_inner), A tiled per batch
    deltaA = jnp.exp(delta_bd[:, None, :] * a_bd[None, :, :])      # (L, n, B*d_inner)

    def bcast_state(v):  # (B*L, n) -> (L, n, B*d_inner): value broadcast over d
        return jnp.concatenate(
            [jnp.broadcast_to(v[bb * l:(bb + 1) * l, :, None], (l, n, d_inner))
             for bb in range(bsz)], axis=2)

    b_bc = bcast_state(b_flat)                            # (L, n, B*d_inner)
    c_bc = bcast_state(c_flat)                            # (L, n, B*d_inner)
    dBu = ud_bd[:, None, :] * b_bc                        # (L, n, B*d_inner)

    # ---- selective scan: state h = (n, B*d_inner) = two full f32 vregs ----
    h = jnp.zeros((n, bsz * d_inner), jnp.float32)
    ys = []
    for t in range(l):
        h = deltaA[t] * h + dBu[t]                        # VPU mul-add, lane-dense
        ys.append(jnp.sum(c_bc[t] * h, axis=0, keepdims=True))   # (1, B*d_inner)
    y_bd = jnp.concatenate(ys, axis=0)                    # (L, B*d_inner)

    # ---- unfold, skip term, gating, out_proj ----
    y = jnp.concatenate(
        [y_bd[:, bb * d_inner:(bb + 1) * d_inner] for bb in range(bsz)], axis=0)  # (B*L, d_inner)
    d_vec = slab_ref[d_conv + 2:d_conv + 3, :d_inner]     # (1, d_inner)
    y = y + xc * d_vec
    y = y * (res * jax.nn.sigmoid(res))                   # gate with SiLU(res)
    out_full = _mxu(y, w_big_ref[...])                    # (B*L, 128); last d_model cols = out_proj
    out_ref[...] = out_full[:, d_inner + 2 * n:d_inner + 2 * n + d_model]


def mamba_block(x, params):
    b, l, d_model = x.shape
    d_inner = params["conv_w"].shape[1]

    # Fuse / pre-cast weights once in the wrapper (mathematically identical).
    w_in = jnp.concatenate([params["w_in_x"], params["w_in_res"]],
                           axis=1).astype(jnp.bfloat16)                     # (d_model, 2*d_inner)
    w_big = jnp.concatenate(
        [params["w_xd"] @ params["w_dt"], params["w_xb"], params["w_xc"], params["w_out"]],
        axis=1).astype(jnp.bfloat16)                                        # (d_inner, 128)

    # f32 parameter slab: rows [0:4]=conv taps, [4]=conv bias, [5]=dt bias,
    # [6]=D, [7]=pad (cols :d_inner), rows [8:8+n]=A_log tiled across batch lanes.
    pad_rows = _SLAB_VEC_ROWS - D_CONV - 3
    vec = jnp.concatenate(
        [params["conv_w"], params["conv_b"], params["b_dt"], params["d_vec"],
         jnp.zeros((pad_rows, d_inner), jnp.float32)], axis=0)              # (8, d_inner)
    vec = jnp.pad(vec, ((0, 0), (0, (b - 1) * d_inner)))                    # (8, B*d_inner)
    a_log_bd = jnp.tile(params["a_log_t"], (1, b))                          # (n, B*d_inner)
    slab = jnp.concatenate([vec, a_log_bd], axis=0)                         # (8+n, B*d_inner)

    x_flat = x.reshape(b * l, d_model).astype(jnp.bfloat16)

    kernel = functools.partial(mamba_block_kernel, seq_len=l, d_conv=D_CONV)
    vmem = pl.BlockSpec(memory_space=pltpu.MemorySpace.VMEM)
    out_flat = pl.pallas_call(
        kernel,
        out_shape=jax.ShapeDtypeStruct((b * l, d_model), jnp.float32),
        in_specs=[vmem, vmem, vmem, vmem],
        out_specs=vmem,
        cost_estimate=pl.CostEstimate(
            flops=850_000, transcendentals=23_000, bytes_accessed=40_000),
    )(x_flat, w_in, w_big, slab)
    return out_flat.reshape(b, l, d_model)


def init_params(key):
    keys = jax.random.split(key, 10)
    s = 0.1
    p = {}
    p["w_in_x"] = jax.random.normal(keys[0], (D_MODEL, D_INNER), jnp.float32) * s
    p["w_in_res"] = jax.random.normal(keys[1], (D_MODEL, D_INNER), jnp.float32) * s
    p["conv_w"] = jax.random.normal(keys[2], (D_CONV, D_INNER), jnp.float32) * s
    p["conv_b"] = jax.random.normal(keys[3], (1, D_INNER), jnp.float32) * s
    p["w_xd"] = jax.random.normal(keys[4], (D_INNER, DT_RANK), jnp.float32) * s
    p["w_xb"] = jax.random.normal(keys[5], (D_INNER, D_STATE), jnp.float32) * s
    p["w_xc"] = jax.random.normal(keys[6], (D_INNER, D_STATE), jnp.float32) * s
    p["w_dt"] = jax.random.normal(keys[7], (DT_RANK, D_INNER), jnp.float32) * s
    p["b_dt"] = jax.random.normal(keys[8], (1, D_INNER), jnp.float32) * s
    # A_log = log(arange(1, n+1)) repeated over d_inner; stored transposed (n, d_inner).
    p["a_log_t"] = (jnp.log(jnp.arange(1, D_STATE + 1, dtype=jnp.float32))[:, None]
                    * jnp.ones((1, D_INNER), jnp.float32))
    p["d_vec"] = jnp.ones((1, D_INNER), jnp.float32)
    p["w_out"] = jax.random.normal(keys[9], (D_INNER, D_MODEL), jnp.float32) * s
    return p


def mamba_block_reference(x, p):
    """Pure-JAX f32 mirror of the PyTorch forward (for validation, unfused params)."""
    b, l, _ = x.shape
    xc = x @ p["w_in_x"]
    res = x @ p["w_in_res"]
    xp = jnp.pad(xc, ((0, 0), (D_CONV - 1, 0), (0, 0)))
    conv = sum(xp[:, k:k + l, :] * p["conv_w"][k] for k in range(D_CONV)) + p["conv_b"]
    xc = conv * jax.nn.sigmoid(conv)
    delta = jax.nn.softplus(xc @ p["w_xd"] @ p["w_dt"] + p["b_dt"])
    b_mat = xc @ p["w_xb"]
    c_mat = xc @ p["w_xc"]
    A = -jnp.exp(p["a_log_t"].T)                                  # (d_inner, n)
    deltaA = jnp.exp(delta[..., None] * A)                        # (b, l, d_in, n)
    dbu = (delta * xc)[..., None] * b_mat[:, :, None, :]          # (b, l, d_in, n)
    h = jnp.zeros((b, D_INNER, D_STATE), jnp.float32)
    ys = []
    for t in range(l):
        h = deltaA[:, t] * h + dbu[:, t]
        ys.append(jnp.einsum("bdn,bn->bd", h, c_mat[:, t]))
    y = jnp.stack(ys, axis=1) + xc * p["d_vec"]
    y = y * (res * jax.nn.sigmoid(res))
    return y @ p["w_out"]


if __name__ == "__main__":
    key = jax.random.PRNGKey(0)
    kx, kp = jax.random.split(key)
    x = jax.random.normal(kx, (BATCH, SEQLEN, D_MODEL), jnp.float32)
    params = init_params(kp)

    out = jax.block_until_ready(mamba_block(x, params))
    assert out.shape == (BATCH, SEQLEN, D_MODEL)

    ref = mamba_block_reference(x, params)
    err = float(jnp.max(jnp.abs(out - ref)))
    # bf16 MXU operands (f32 accumulate): ~1e-3-level relative error vs f32 reference.
    assert jnp.allclose(out, ref, atol=2e-2, rtol=2e-2), f"max abs err {err}"
    # TODO(synk): self.model (WTConv1d/BatchNorm/MaxPool/Dropout) and self.gru (LSTM)
    # are unused by MambaBlock.forward and therefore not implemented.
    print("KERNEL_OK")
</pallas_src>

<mosaic_0001>
module attributes {stable_mosaic.version = 11 : i64} {
  func.func @mamba_block_kernel(%arg0: memref<16x32xbf16, #tpu.memory_space<vmem>>, %arg1: memref<32x128xbf16, #tpu.memory_space<vmem>>, %arg2: memref<64x128xbf16, #tpu.memory_space<vmem>>, %arg3: memref<24x128xf32, #tpu.memory_space<vmem>>, %arg4: memref<16x32xf32, #tpu.memory_space<vmem>>) attributes {dimension_semantics = [], scalar_prefetch = 0 : i64, scratch_operands = 0 : i64, tpu.core_type = #tpu.core_type<tc>} {
    %c0 = arith.constant 0 : index
    %c0_0 = arith.constant 0 : index
    %0 = vector.load %arg0[%c0, %c0_0] : memref<16x32xbf16, #tpu.memory_space<vmem>>, vector<16x32xbf16>
    %c0_1 = arith.constant 0 : index
    %c0_2 = arith.constant 0 : index
    %1 = vector.load %arg1[%c0_1, %c0_2] : memref<32x128xbf16, #tpu.memory_space<vmem>>, vector<32x128xbf16>
    %cst = arith.constant dense<0.000000e+00> : vector<16x128xf32>
    %2 = tpu.matmul %0, %1, %cst {dimension_numbers = #tpu.dot_dimension_numbers<[1], [0], [0], [1], [0, 0, 1, 1], [], []>} : vector<16x32xbf16>, vector<32x128xbf16>, vector<16x128xf32> -> vector<16x128xf32>
    %3 = vector.extract_strided_slice %2 {offsets = [0, 0], sizes = [16, 64], strides = [1, 1]} : vector<16x128xf32> to vector<16x64xf32>
    %4 = vector.extract_strided_slice %2 {offsets = [0, 64], sizes = [16, 64], strides = [1, 1]} : vector<16x128xf32> to vector<16x64xf32>
    %c0_3 = arith.constant 0 : index
    %c0_4 = arith.constant 0 : index
    %5 = vector.load %arg3[%c0_3, %c0_4] : memref<24x128xf32, #tpu.memory_space<vmem>>, vector<4x64xf32>
    %c4 = arith.constant 4 : index
    %c0_5 = arith.constant 0 : index
    %6 = vector.load %arg3[%c4, %c0_5] : memref<24x128xf32, #tpu.memory_space<vmem>>, vector<1x64xf32>
    %7 = tpu.iota {dimensions = array<i32: 0>} : vector<16x64xi32>
    %c8_i32 = arith.constant 8 : i32
    %c0_i32 = arith.constant 0 : i32
    %8 = arith.cmpi eq, %c8_i32, %c0_i32 : i32
    %c1_i32 = arith.constant 1 : i32
    %9 = arith.select %8, %c1_i32, %c8_i32 : i32
    %10 = vector.broadcast %9 : i32 to vector<16x64xi32>
    %11 = arith.remsi %7, %10 : vector<16x64xi32>
    %c0_i32_6 = arith.constant 0 : i32
    %12 = vector.broadcast %c0_i32_6 : i32 to vector<16x64xi32>
    %13 = arith.cmpi ne, %11, %12 : vector<16x64xi32>
    %c0_i32_7 = arith.constant 0 : i32
    %14 = vector.broadcast %c0_i32_7 : i32 to vector<16x64xi32>
    %15 = arith.cmpi slt, %11, %14 : vector<16x64xi32>
    %c0_i32_8 = arith.constant 0 : i32
    %16 = arith.cmpi slt, %9, %c0_i32_8 : i32
    %17 = vector.broadcast %16 : i1 to vector<16x64xi1>
    %18 = vector.broadcast %17 : vector<16x64xi1> to vector<16x64xi1>
    %19 = arith.xori %15, %18 : vector<16x64xi1>
    %20 = arith.andi %19, %13 : vector<16x64xi1>
    %21 = vector.broadcast %9 : i32 to vector<16x64xi32>
    %22 = arith.addi %11, %21 : vector<16x64xi32>
    %23 = arith.select %20, %22, %11 : vector<16x64xi1>, vector<16x64xi32>
    %24 = vector.extract_strided_slice %5 {offsets = [3, 0], sizes = [1, 64], strides = [1, 1]} : vector<4x64xf32> to vector<1x64xf32>
    %25 = vector.broadcast %24 : vector<1x64xf32> to vector<16x64xf32>
    %26 = arith.mulf %3, %25 : vector<16x64xf32>
    %c3_i32 = arith.constant 3 : i32
    %27 = tpu.dynamic_rotate %2 by %c3_i32 dim 0 : vector<16x128xf32>, i32 -> vector<16x128xf32>
    %28 = vector.extract_strided_slice %27 {offsets = [0, 0], sizes = [16, 64], strides = [1, 1]} : vector<16x128xf32> to vector<16x64xf32>
    %c3_i32_9 = arith.constant 3 : i32
    %29 = vector.broadcast %c3_i32_9 : i32 to vector<16x64xi32>
    %30 = arith.cmpi sge, %23, %29 : vector<16x64xi32>
    %cst_10 = arith.constant 0.000000e+00 : f32
    %31 = vector.broadcast %cst_10 : f32 to vector<16x64xf32>
    %32 = arith.select %30, %28, %31 : vector<16x64xi1>, vector<16x64xf32>
    %33 = vector.extract_strided_slice %5 {offsets = [0, 0], sizes = [1, 64], strides = [1, 1]} : vector<4x64xf32> to vector<1x64xf32>
    %34 = vector.broadcast %33 : vector<1x64xf32> to vector<16x64xf32>
    %35 = arith.mulf %32, %34 : vector<16x64xf32>
    %36 = arith.addf %26, %35 : vector<16x64xf32>
    %c2_i32 = arith.constant 2 : i32
    %37 = tpu.dynamic_rotate %2 by %c2_i32 dim 0 : vector<16x128xf32>, i32 -> vector<16x128xf32>
    %38 = vector.extract_strided_slice %37 {offsets = [0, 0], sizes = [16, 64], strides = [1, 1]} : vector<16x128xf32> to vector<16x64xf32>
    %c2_i32_11 = arith.constant 2 : i32
    %39 = vector.broadcast %c2_i32_11 : i32 to vector<16x64xi32>
    %40 = arith.cmpi sge, %23, %39 : vector<16x64xi32>
    %cst_12 = arith.constant 0.000000e+00 : f32
    %41 = vector.broadcast %cst_12 : f32 to vector<16x64xf32>
    %42 = arith.select %40, %38, %41 : vector<16x64xi1>, vector<16x64xf32>
    %43 = vector.extract_strided_slice %5 {offsets = [1, 0], sizes = [1, 64], strides = [1, 1]} : vector<4x64xf32> to vector<1x64xf32>
    %44 = vector.broadcast %43 : vector<1x64xf32> to vector<16x64xf32>
    %45 = arith.mulf %42, %44 : vector<16x64xf32>
    %46 = arith.addf %36, %45 : vector<16x64xf32>
    %c1_i32_13 = arith.constant 1 : i32
    %47 = tpu.dynamic_rotate %2 by %c1_i32_13 dim 0 : vector<16x128xf32>, i32 -> vector<16x128xf32>
    %48 = vector.extract_strided_slice %47 {offsets = [0, 0], sizes = [16, 64], strides = [1, 1]} : vector<16x128xf32> to vector<16x64xf32>
    %c1_i32_14 = arith.constant 1 : i32
    %49 = vector.broadcast %c1_i32_14 : i32 to vector<16x64xi32>
    %50 = arith.cmpi sge, %23, %49 : vector<16x64xi32>
    %cst_15 = arith.constant 0.000000e+00 : f32
    %51 = vector.broadcast %cst_15 : f32 to vector<16x64xf32>
    %52 = arith.select %50, %48, %51 : vector<16x64xi1>, vector<16x64xf32>
    %53 = vector.extract_strided_slice %5 {offsets = [2, 0], sizes = [1, 64], strides = [1, 1]} : vector<4x64xf32> to vector<1x64xf32>
    %54 = vector.broadcast %53 : vector<1x64xf32> to vector<16x64xf32>
    %55 = arith.mulf %52, %54 : vector<16x64xf32>
    %56 = arith.addf %46, %55 : vector<16x64xf32>
    %57 = vector.broadcast %6 : vector<1x64xf32> to vector<16x64xf32>
    %58 = arith.addf %56, %57 : vector<16x64xf32>
    %59 = arith.negf %58 : vector<16x64xf32>
    %60 = math.exp %59 : vector<16x64xf32>
    %cst_16 = arith.constant 1.000000e+00 : f32
    %61 = vector.broadcast %cst_16 : f32 to vector<16x64xf32>
    %62 = arith.addf %61, %60 : vector<16x64xf32>
    %63 = arith.divf %61, %62 : vector<16x64xf32>
    %64 = arith.mulf %58, %63 : vector<16x64xf32>
    %c0_17 = arith.constant 0 : index
    %c0_18 = arith.constant 0 : index
    %65 = vector.load %arg2[%c0_17, %c0_18] : memref<64x128xbf16, #tpu.memory_space<vmem>>, vector<64x128xbf16>
    %66 = arith.truncf %64 : vector<16x64xf32> to vector<16x64xbf16>
    %cst_19 = arith.constant dense<0.000000e+00> : vector<16x128xf32>
    %67 = tpu.matmul %66, %65, %cst_19 {dimension_numbers = #tpu.dot_dimension_numbers<[1], [0], [0], [1], [0, 0, 1, 1], [], []>} : vector<16x64xbf16>, vector<64x128xbf16>, vector<16x128xf32> -> vector<16x128xf32>
    %68 = vector.extract_strided_slice %67 {offsets = [0, 0], sizes = [16, 64], strides = [1, 1]} : vector<16x128xf32> to vector<16x64xf32>
    %c5 = arith.constant 5 : index
    %c0_20 = arith.constant 0 : index
    %69 = vector.load %arg3[%c5, %c0_20] : memref<24x128xf32, #tpu.memory_space<vmem>>, vector<1x64xf32>
    %70 = vector.broadcast %69 : vector<1x64xf32> to vector<16x64xf32>
    %71 = arith.addf %68, %70 : vector<16x64xf32>
    %cst_21 = arith.constant 2.000000e+01 : f32
    %72 = vector.broadcast %cst_21 : f32 to vector<16x64xf32>
    %73 = arith.cmpf ogt, %71, %72 : vector<16x64xf32>
    %74 = math.exp %71 : vector<16x64xf32>
    %75 = math.log1p %74 : vector<16x64xf32>
    %76 = arith.select %73, %71, %75 : vector<16x64xi1>, vector<16x64xf32>
    %77 = vector.extract_strided_slice %67 {offsets = [0, 64], sizes = [16, 16], strides = [1, 1]} : vector<16x128xf32> to vector<16x16xf32>
    %78 = vector.extract_strided_slice %67 {offsets = [0, 80], sizes = [16, 16], strides = [1, 1]} : vector<16x128xf32> to vector<16x16xf32>
    %79 = vector.extract_strided_slice %76 {offsets = [0, 0], sizes = [8, 64], strides = [1, 1]} : vector<16x64xf32> to vector<8x64xf32>
    %80 = vector.extract_strided_slice %76 {offsets = [8, 0], sizes = [8, 64], strides = [1, 1]} : vector<16x64xf32> to vector<8x64xf32>
    %81 = tpu.concatenate %79, %80 in 1 : vector<8x64xf32>, vector<8x64xf32> -> vector<8x128xf32>
    %82 = arith.mulf %76, %64 : vector<16x64xf32>
    %83 = vector.extract_strided_slice %82 {offsets = [0, 0], sizes = [8, 64], strides = [1, 1]} : vector<16x64xf32> to vector<8x64xf32>
    %84 = vector.extract_strided_slice %82 {offsets = [8, 0], sizes = [8, 64], strides = [1, 1]} : vector<16x64xf32> to vector<8x64xf32>
    %85 = tpu.concatenate %83, %84 in 1 : vector<8x64xf32>, vector<8x64xf32> -> vector<8x128xf32>
    %c8 = arith.constant 8 : index
    %c0_22 = arith.constant 0 : index
    %86 = vector.load %arg3[%c8, %c0_22] : memref<24x128xf32, #tpu.memory_space<vmem>>, vector<16x128xf32>
    %87 = math.exp %86 : vector<16x128xf32>
    %cst_23 = arith.constant 0.000000e+00 : f32
    %88 = vector.broadcast %cst_23 : f32 to vector<16x128xf32>
    %89 = arith.subf %88, %87 : vector<16x128xf32>
    %90 = vector.shape_cast %81 : vector<8x128xf32> to vector<8x1x128xf32>
    %91 = vector.shape_cast %89 : vector<16x128xf32> to vector<1x16x128xf32>
    %92 = vector.broadcast %90 : vector<8x1x128xf32> to vector<8x16x128xf32>
    %93 = vector.broadcast %91 : vector<1x16x128xf32> to vector<8x16x128xf32>
    %94 = arith.mulf %92, %93 : vector<8x16x128xf32>
    %95 = math.exp %94 : vector<8x16x128xf32>
    %96 = vector.extract_strided_slice %77 {offsets = [0, 0], sizes = [8, 16], strides = [1, 1]} : vector<16x16xf32> to vector<8x16xf32>
    %97 = vector.shape_cast %96 : vector<8x16xf32> to vector<8x16x1xf32>
    %98 = vector.shape_cast %97 : vector<8x16x1xf32> to vector<8x16x1xf32>
    %99 = vector.broadcast %98 : vector<8x16x1xf32> to vector<8x16x64xf32>
    %100 = vector.extract_strided_slice %77 {offsets = [8, 0], sizes = [8, 16], strides = [1, 1]} : vector<16x16xf32> to vector<8x16xf32>
    %101 = vector.shape_cast %100 : vector<8x16xf32> to vector<8x16x1xf32>
    %102 = vector.shape_cast %101 : vector<8x16x1xf32> to vector<8x16x1xf32>
    %103 = vector.broadcast %102 : vector<8x16x1xf32> to vector<8x16x64xf32>
    %104 = tpu.concatenate %99, %103 in 2 : vector<8x16x64xf32>, vector<8x16x64xf32> -> vector<8x16x128xf32>
    %105 = vector.extract_strided_slice %78 {offsets = [0, 0], sizes = [8, 16], strides = [1, 1]} : vector<16x16xf32> to vector<8x16xf32>
    %106 = vector.shape_cast %105 : vector<8x16xf32> to vector<8x16x1xf32>
    %107 = vector.shape_cast %106 : vector<8x16x1xf32> to vector<8x16x1xf32>
    %108 = vector.broadcast %107 : vector<8x16x1xf32> to vector<8x16x64xf32>
    %109 = vector.extract_strided_slice %78 {offsets = [8, 0], sizes = [8, 16], strides = [1, 1]} : vector<16x16xf32> to vector<8x16xf32>
    %110 = vector.shape_cast %109 : vector<8x16xf32> to vector<8x16x1xf32>
    %111 = vector.shape_cast %110 : vector<8x16x1xf32> to vector<8x16x1xf32>
    %112 = vector.broadcast %111 : vector<8x16x1xf32> to vector<8x16x64xf32>
    %113 = tpu.concatenate %108, %112 in 2 : vector<8x16x64xf32>, vector<8x16x64xf32> -> vector<8x16x128xf32>
    %114 = vector.shape_cast %85 : vector<8x128xf32> to vector<8x1x128xf32>
    %115 = vector.broadcast %114 : vector<8x1x128xf32> to vector<8x16x128xf32>
    %116 = arith.mulf %115, %104 : vector<8x16x128xf32>
    %cst_24 = arith.constant 0.000000e+00 : f32
    %117 = vector.broadcast %cst_24 : f32 to vector<16x128xf32>
    %118 = vector.extract_strided_slice %95 {offsets = [0, 0, 0], sizes = [1, 16, 128], strides = [1, 1, 1]} : vector<8x16x128xf32> to vector<1x16x128xf32>
    %119 = vector.shape_cast %118 : vector<1x16x128xf32> to vector<16x128xf32>
    %120 = arith.mulf %119, %117 : vector<16x128xf32>
    %121 = vector.extract_strided_slice %116 {offsets = [0, 0, 0], sizes = [1, 16, 128], strides = [1, 1, 1]} : vector<8x16x128xf32> to vector<1x16x128xf32>
    %122 = vector.shape_cast %121 : vector<1x16x128xf32> to vector<16x128xf32>
    %123 = arith.addf %120, %122 : vector<16x128xf32>
    %124 = vector.extract_strided_slice %113 {offsets = [0, 0, 0], sizes = [1, 16, 128], strides = [1, 1, 1]} : vector<8x16x128xf32> to vector<1x16x128xf32>
    %125 = vector.shape_cast %124 : vector<1x16x128xf32> to vector<16x128xf32>
    %126 = arith.mulf %125, %123 : vector<16x128xf32>
    %cst_25 = arith.constant dense<0.000000e+00> : vector<128xf32>
    %127 = vector.multi_reduction <add>, %126, %cst_25 [0] : vector<16x128xf32> to vector<128xf32>
    %128 = vector.shape_cast %127 : vector<128xf32> to vector<1x128xf32>
    %129 = vector.extract_strided_slice %95 {offsets = [1, 0, 0], sizes = [1, 16, 128], strides = [1, 1, 1]} : vector<8x16x128xf32> to vector<1x16x128xf32>
    %130 = vector.shape_cast %129 : vector<1x16x128xf32> to vector<16x128xf32>
    %131 = arith.mulf %130, %123 : vector<16x128xf32>
    %132 = vector.extract_strided_slice %116 {offsets = [1, 0, 0], sizes = [1, 16, 128], strides = [1, 1, 1]} : vector<8x16x128xf32> to vector<1x16x128xf32>
    %133 = vector.shape_cast %132 : vector<1x16x128xf32> to vector<16x128xf32>
    %134 = arith.addf %131, %133 : vector<16x128xf32>
    %135 = vector.extract_strided_slice %113 {offsets = [1, 0, 0], sizes = [1, 16, 128], strides = [1, 1, 1]} : vector<8x16x128xf32> to vector<1x16x128xf32>
    %136 = vector.shape_cast %135 : vector<1x16x128xf32> to vector<16x128xf32>
    %137 = arith.mulf %136, %134 : vector<16x128xf32>
    %cst_26 = arith.constant dense<0.000000e+00> : vector<128xf32>
    %138 = vector.multi_reduction <add>, %137, %cst_26 [0] : vector<16x128xf32> to vector<128xf32>
    %139 = vector.shape_cast %138 : vector<128xf32> to vector<1x128xf32>
    %140 = vector.extract_strided_slice %95 {offsets = [2, 0, 0], sizes = [1, 16, 128], strides = [1, 1, 1]} : vector<8x16x128xf32> to vector<1x16x128xf32>
    %141 = vector.shape_cast %140 : vector<1x16x128xf32> to vector<16x128xf32>
    %142 = arith.mulf %141, %134 : vector<16x128xf32>
    %143 = vector.extract_strided_slice %116 {offsets = [2, 0, 0], sizes = [1, 16, 128], strides = [1, 1, 1]} : vector<8x16x128xf32> to vector<1x16x128xf32>
    %144 = vector.shape_cast %143 : vector<1x16x128xf32> to vector<16x128xf32>
    %145 = arith.addf %142, %144 : vector<16x128xf32>
    %146 = vector.extract_strided_slice %113 {offsets = [2, 0, 0], sizes = [1, 16, 128], strides = [1, 1, 1]} : vector<8x16x128xf32> to vector<1x16x128xf32>
    %147 = vector.shape_cast %146 : vector<1x16x128xf32> to vector<16x128xf32>
    %148 = arith.mulf %147, %145 : vector<16x128xf32>
    %cst_27 = arith.constant dense<0.000000e+00> : vector<128xf32>
    %149 = vector.multi_reduction <add>, %148, %cst_27 [0] : vector<16x128xf32> to vector<128xf32>
    %150 = vector.shape_cast %149 : vector<128xf32> to vector<1x128xf32>
    %151 = vector.extract_strided_slice %95 {offsets = [3, 0, 0], sizes = [1, 16, 128], strides = [1, 1, 1]} : vector<8x16x128xf32> to vector<1x16x128xf32>
    %152 = vector.shape_cast %151 : vector<1x16x128xf32> to vector<16x128xf32>
    %153 = arith.mulf %152, %145 : vector<16x128xf32>
    %154 = vector.extract_strided_slice %116 {offsets = [3, 0, 0], sizes = [1, 16, 128], strides = [1, 1, 1]} : vector<8x16x128xf32> to vector<1x16x128xf32>
    %155 = vector.shape_cast %154 : vector<1x16x128xf32> to vector<16x128xf32>
    %156 = arith.addf %153, %155 : vector<16x128xf32>
    %157 = vector.extract_strided_slice %113 {offsets = [3, 0, 0], sizes = [1, 16, 128], strides = [1, 1, 1]} : vector<8x16x128xf32> to vector<1x16x128xf32>
    %158 = vector.shape_cast %157 : vector<1x16x128xf32> to vector<16x128xf32>
    %159 = arith.mulf %158, %156 : vector<16x128xf32>
    %cst_28 = arith.constant dense<0.000000e+00> : vector<128xf32>
    %160 = vector.multi_reduction <add>, %159, %cst_28 [0] : vector<16x128xf32> to vector<128xf32>
    %161 = vector.shape_cast %160 : vector<128xf32> to vector<1x128xf32>
    %162 = vector.extract_strided_slice %95 {offsets = [4, 0, 0], sizes = [1, 16, 128], strides = [1, 1, 1]} : vector<8x16x128xf32> to vector<1x16x128xf32>
    %163 = vector.shape_cast %162 : vector<1x16x128xf32> to vector<16x128xf32>
    %164 = arith.mulf %163, %156 : vector<16x128xf32>
    %165 = vector.extract_strided_slice %116 {offsets = [4, 0, 0], sizes = [1, 16, 128], strides = [1, 1, 1]} : vector<8x16x128xf32> to vector<1x16x128xf32>
    %166 = vector.shape_cast %165 : vector<1x16x128xf32> to vector<16x128xf32>
    %167 = arith.addf %164, %166 : vector<16x128xf32>
    %168 = vector.extract_strided_slice %113 {offsets = [4, 0, 0], sizes = [1, 16, 128], strides = [1, 1, 1]} : vector<8x16x128xf32> to vector<1x16x128xf32>
    %169 = vector.shape_cast %168 : vector<1x16x128xf32> to vector<16x128xf32>
    %170 = arith.mulf %169, %167 : vector<16x128xf32>
    %cst_29 = arith.constant dense<0.000000e+00> : vector<128xf32>
    %171 = vector.multi_reduction <add>, %170, %cst_29 [0] : vector<16x128xf32> to vector<128xf32>
    %172 = vector.shape_cast %171 : vector<128xf32> to vector<1x128xf32>
    %173 = vector.extract_strided_slice %95 {offsets = [5, 0, 0], sizes = [1, 16, 128], strides = [1, 1, 1]} : vector<8x16x128xf32> to vector<1x16x128xf32>
    %174 = vector.shape_cast %173 : vector<1x16x128xf32> to vector<16x128xf32>
    %175 = arith.mulf %174, %167 : vector<16x128xf32>
    %176 = vector.extract_strided_slice %116 {offsets = [5, 0, 0], sizes = [1, 16, 128], strides = [1, 1, 1]} : vector<8x16x128xf32> to vector<1x16x128xf32>
    %177 = vector.shape_cast %176 : vector<1x16x128xf32> to vector<16x128xf32>
    %178 = arith.addf %175, %177 : vector<16x128xf32>
    %179 = vector.extract_strided_slice %113 {offsets = [5, 0, 0], sizes = [1, 16, 128], strides = [1, 1, 1]} : vector<8x16x128xf32> to vector<1x16x128xf32>
    %180 = vector.shape_cast %179 : vector<1x16x128xf32> to vector<16x128xf32>
    %181 = arith.mulf %180, %178 : vector<16x128xf32>
    %cst_30 = arith.constant dense<0.000000e+00> : vector<128xf32>
    %182 = vector.multi_reduction <add>, %181, %cst_30 [0] : vector<16x128xf32> to vector<128xf32>
    %183 = vector.shape_cast %182 : vector<128xf32> to vector<1x128xf32>
    %184 = vector.extract_strided_slice %95 {offsets = [6, 0, 0], sizes = [1, 16, 128], strides = [1, 1, 1]} : vector<8x16x128xf32> to vector<1x16x128xf32>
    %185 = vector.shape_cast %184 : vector<1x16x128xf32> to vector<16x128xf32>
    %186 = arith.mulf %185, %178 : vector<16x128xf32>
    %187 = vector.extract_strided_slice %116 {offsets = [6, 0, 0], sizes = [1, 16, 128], strides = [1, 1, 1]} : vector<8x16x128xf32> to vector<1x16x128xf32>
    %188 = vector.shape_cast %187 : vector<1x16x128xf32> to vector<16x128xf32>
    %189 = arith.addf %186, %188 : vector<16x128xf32>
    %190 = vector.extract_strided_slice %113 {offsets = [6, 0, 0], sizes = [1, 16, 128], strides = [1, 1, 1]} : vector<8x16x128xf32> to vector<1x16x128xf32>
    %191 = vector.shape_cast %190 : vector<1x16x128xf32> to vector<16x128xf32>
    %192 = arith.mulf %191, %189 : vector<16x128xf32>
    %cst_31 = arith.constant dense<0.000000e+00> : vector<128xf32>
    %193 = vector.multi_reduction <add>, %192, %cst_31 [0] : vector<16x128xf32> to vector<128xf32>
    %194 = vector.shape_cast %193 : vector<128xf32> to vector<1x128xf32>
    %195 = vector.extract_strided_slice %95 {offsets = [7, 0, 0], sizes = [1, 16, 128], strides = [1, 1, 1]} : vector<8x16x128xf32> to vector<1x16x128xf32>
    %196 = vector.shape_cast %195 : vector<1x16x128xf32> to vector<16x128xf32>
    %197 = arith.mulf %196, %189 : vector<16x128xf32>
    %198 = vector.extract_strided_slice %116 {offsets = [7, 0, 0], sizes = [1, 16, 128], strides = [1, 1, 1]} : vector<8x16x128xf32> to vector<1x16x128xf32>
    %199 = vector.shape_cast %198 : vector<1x16x128xf32> to vector<16x128xf32>
    %200 = arith.addf %197, %199 : vector<16x128xf32>
    %201 = vector.extract_strided_slice %113 {offsets = [7, 0, 0], sizes = [1, 16, 128], strides = [1, 1, 1]} : vector<8x16x128xf32> to vector<1x16x128xf32>
    %202 = vector.shape_cast %201 : vector<1x16x128xf32> to vector<16x128xf32>
    %203 = arith.mulf %202, %200 : vector<16x128xf32>
    %cst_32 = arith.constant dense<0.000000e+00> : vector<128xf32>
    %204 = vector.multi_reduction <add>, %203, %cst_32 [0] : vector<16x128xf32> to vector<128xf32>
    %205 = vector.shape_cast %204 : vector<128xf32> to vector<1x128xf32>
    %206 = tpu.concatenate %128, %139, %150, %161, %172, %183, %194, %205 in 0 : vector<1x128xf32>, vector<1x128xf32>, vector<1x128xf32>, vector<1x128xf32>, vector<1x128xf32>, vector<1x128xf32>, vector<1x128xf32>, vector<1x128xf32> -> vector<8x128xf32>
    %207 = vector.extract_strided_slice %206 {offsets = [0, 0], sizes = [8, 64], strides = [1, 1]} : vector<8x128xf32> to vector<8x64xf32>
    %208 = vector.extract_strided_slice %206 {offsets = [0, 64], sizes = [8, 64], strides = [1, 1]} : vector<8x128xf32> to vector<8x64xf32>
    %209 = tpu.concatenate %207, %208 in 0 : vector<8x64xf32>, vector<8x64xf32> -> vector<16x64xf32>
    %c6 = arith.constant 6 : index
    %c0_33 = arith.constant 0 : index
    %210 = vector.load %arg3[%c6, %c0_33] : memref<24x128xf32, #tpu.memory_space<vmem>>, vector<1x64xf32>
    %211 = vector.broadcast %210 : vector<1x64xf32> to vector<16x64xf32>
    %212 = arith.mulf %64, %211 : vector<16x64xf32>
    %213 = arith.addf %209, %212 : vector<16x64xf32>
    %214 = arith.negf %4 : vector<16x64xf32>
    %215 = math.exp %214 : vector<16x64xf32>
    %cst_34 = arith.constant 1.000000e+00 : f32
    %216 = vector.broadcast %cst_34 : f32 to vector<16x64xf32>
    %217 = arith.addf %216, %215 : vector<16x64xf32>
    %218 = arith.divf %216, %217 : vector<16x64xf32>
    %219 = arith.mulf %4, %218 : vector<16x64xf32>
    %220 = arith.mulf %213, %219 : vector<16x64xf32>
    %c0_35 = arith.constant 0 : index
    %c0_36 = arith.constant 0 : index
    %221 = vector.load %arg2[%c0_35, %c0_36] : memref<64x128xbf16, #tpu.memory_space<vmem>>, vector<64x128xbf16>
    %222 = arith.truncf %220 : vector<16x64xf32> to vector<16x64xbf16>
    %cst_37 = arith.constant dense<0.000000e+00> : vector<16x128xf32>
    %223 = tpu.matmul %222, %221, %cst_37 {dimension_numbers = #tpu.dot_dimension_numbers<[1], [0], [0], [1], [0, 0, 1, 1], [], []>} : vector<16x64xbf16>, vector<64x128xbf16>, vector<16x128xf32> -> vector<16x128xf32>
    %224 = vector.extract_strided_slice %223 {offsets = [0, 96], sizes = [16, 32], strides = [1, 1]} : vector<16x128xf32> to vector<16x32xf32>
    %c0_38 = arith.constant 0 : index
    %c0_39 = arith.constant 0 : index
    %225 = vector.load %arg4[%c0_38, %c0_39] : memref<16x32xf32, #tpu.memory_space<vmem>>, vector<16x32xf32>
    tpu.vector_store %arg4[%c0_38, %c0_39], %224 {strides = array<i32>} : memref<16x32xf32, #tpu.memory_space<vmem>>, vector<16x32xf32>,
    return
  }
}

</mosaic_0001>

<llo_original>
// kernel: tpu_custom_call.1
$region0: #{tpu_custom_call.1}
  #allocation0 [shape = 'u32[]', space=smem, size = 0x4, offset = 0x4, fixed_abs, tag = 'smem constant byte address 0x4 - core index']
  #allocation1 [shape = 'u32[144,128]{1,0:T(1,128)}', space=vmem, size = 0x12000, scoped, tag = 'internal scratch']
  %s0 = inlined_call_operand.hbm [shape: bf16[16,32], index: 0, kind: input, shape index: {}]
  %s1 = inlined_call_operand.hbm [shape: bf16[32,128], index: 1, kind: input, shape index: {}]
  %s2 = inlined_call_operand.hbm [shape: bf16[64,128], index: 2, kind: input, shape index: {}]
  %s3 = inlined_call_operand.hbm [shape: f32[24,128], index: 3, kind: input, shape index: {}]
  %s4 = inlined_call_operand.hbm [shape: f32[16,32], index: 4, kind: output, shape index: {}]
  %s5 = sld [smem:[#allocation0]]
  $region42: #{tpu_custom_call.1} parent=0
    _
  %s7 = ssub.s32 1, %s5
  %s8 = scalar_select 0, %s7, %s5
  $region1: #{tpu_custom_call.1} parent=0
    #allocation2 [shape = 'u8[4096]{0}', space=vmem, size = 0x1000, scoped, tag = 'input window, operand 0, single buffered']
    #allocation3 [shape = 's32[1]{0}', space=sflag, size = 0x4, scoped, tag = 'scoped memory for tpu_custom_call.1']
    #allocation4 [shape = 's32[1]{0}', space=sflag, size = 0x4, scoped, tag = 'scoped memory for tpu_custom_call.1']
    #allocation5 [shape = 'u8[8192]{0}', space=vmem, size = 0x2000, scoped, tag = 'input window, operand 1, single buffered']
    #allocation6 [shape = 's32[1]{0}', space=sflag, size = 0x4, scoped, tag = 'scoped memory for tpu_custom_call.1']
    #allocation7 [shape = 'u8[16384]{0}', space=vmem, size = 0x4000, scoped, tag = 'input window, operand 2, single buffered']
    #allocation8 [shape = 'u8[12288]{0}', space=vmem, size = 0x3000, scoped, tag = 'input window, operand 3, single buffered']
    #allocation9 [shape = 's32[1]{0}', space=sflag, size = 0x4, scoped, tag = 'scoped memory for tpu_custom_call.1']
    #allocation10 [shape = 'u8[8192]{0}', space=vmem, size = 0x2000, scoped, tag = 'output window, operand 0, single buffered']
    %9 = vsyncpa [#allocation3], 0
    %10 = vsyncpa [#allocation6], 0
    %11 = vsyncpa [#allocation9], 0
    %12 = vsyncpa [#allocation4], 0
    // Predicated region
    $region2: #{tpu_custom_call.1} parent=1 // pred_check
      _
    $region3: #{tpu_custom_call.1} parent=1 // pred_check_branch
      %14 = sbr.rel (0) target = $region5
    $region4: #{tpu_custom_call.1} parent=1 // pred_region
      %s16 = ssub.s32 128, 128
      %17 = vsyncadd [#allocation3], %s16
      %s18 = sshll.u32 [#allocation2], 4
      %s19 = int_to_ptr.vmem [resolvable:$true] %s18
      %24 = dma.hbm_to_vmem [thread:$0]  %s0, 128, %s19, [#allocation3], 64, 64, 4
    $region5: #{tpu_custom_call.1} parent=1 // pred_fallthru
      _
    // Predicated region
    $region6: #{tpu_custom_call.1} parent=1 // pred_check
      _
    $region7: #{tpu_custom_call.1} parent=1 // pred_check_branch
      %26 = sbr.rel (0) target = $region9
    $region8: #{tpu_custom_call.1} parent=1 // pred_region
      %s28 = ssub.s32 256, 256
      %29 = vsyncadd [#allocation6], %s28
      %s30 = sshll.u32 [#allocation5], 4
      %s31 = int_to_ptr.vmem [resolvable:$true] %s30
      %36 = dma.hbm_to_vmem [thread:$0]  %s1, 256, %s31, [#allocation6], 64, 64, 4
    $region9: #{tpu_custom_call.1} parent=1 // pred_fallthru
      _
    // Predicated region
    $region10: #{tpu_custom_call.1} parent=1 // pred_check
      _
    $region11: #{tpu_custom_call.1} parent=1 // pred_check_branch
      %38 = sbr.rel (0) target = $region13
    $region12: #{tpu_custom_call.1} parent=1 // pred_region
      %s40 = ssub.s32 512, 512
      %41 = vsyncadd [#allocation6], %s40
      %s42 = sshll.u32 [#allocation7], 4
      %s43 = int_to_ptr.vmem [resolvable:$true] %s42
      %48 = dma.hbm_to_vmem [thread:$0]  %s2, 512, %s43, [#allocation6], 64, 64, 4
    $region13: #{tpu_custom_call.1} parent=1 // pred_fallthru
      _
    // Predicated region
    $region14: #{tpu_custom_call.1} parent=1 // pred_check
      _
    $region15: #{tpu_custom_call.1} parent=1 // pred_check_branch
      %50 = sbr.rel (0) target = $region17
    $region16: #{tpu_custom_call.1} parent=1 // pred_region
      %s52 = ssub.s32 384, 384
      %53 = vsyncadd [#allocation9], %s52
      %s54 = sshll.u32 [#allocation8], 4
      %s55 = int_to_ptr.vmem [resolvable:$true] %s54
      %60 = dma.hbm_to_vmem [thread:$0]  %s3, 384, %s55, [#allocation9], 128, 128, 8
    $region17: #{tpu_custom_call.1} parent=1 // pred_fallthru
      _
    // Predicated region
    $region18: #{tpu_custom_call.1} parent=1 // pred_check
      _
    $region19: #{tpu_custom_call.1} parent=1 // pred_check_branch
      %62 = sbr.rel (0) target = $region21
    $region20: #{tpu_custom_call.1} parent=1 // pred_region
      %63 = dma.done [#allocation3], 128
    $region21: #{tpu_custom_call.1} parent=1 // pred_fallthru
      _
    // Predicated region
    $region22: #{tpu_custom_call.1} parent=1 // pred_check
      _
    $region23: #{tpu_custom_call.1} parent=1 // pred_check_branch
      %65 = sbr.rel (0) target = $region25
    $region24: #{tpu_custom_call.1} parent=1 // pred_region
      %66 = dma.done [#allocation6], 256
    $region25: #{tpu_custom_call.1} parent=1 // pred_fallthru
      _
    // Predicated region
    $region26: #{tpu_custom_call.1} parent=1 // pred_check
      _
    $region27: #{tpu_custom_call.1} parent=1 // pred_check_branch
      %68 = sbr.rel (0) target = $region29
    $region28: #{tpu_custom_call.1} parent=1 // pred_region
      %69 = dma.done [#allocation6], 512
    $region29: #{tpu_custom_call.1} parent=1 // pred_fallthru
      _
    // Predicated region
    $region30: #{tpu_custom_call.1} parent=1 // pred_check
      _
    $region31: #{tpu_custom_call.1} parent=1 // pred_check_branch
      %71 = sbr.rel (0) target = $region33
    $region32: #{tpu_custom_call.1} parent=1 // pred_region
      %72 = dma.done [#allocation9], 384
    $region33: #{tpu_custom_call.1} parent=1 // pred_fallthru
      _
    %v74 = vld [vmem:[#allocation2] sm:$0xf]
    %v75 = vld [vmem:[#allocation2 + $0x4] sm:$0xf]
    %v76 = vld [vmem:[#allocation5] sm:$0xf]
    %v77 = vld [vmem:[#allocation5 + $0x4] sm:$0xf]
    %v78 = vld [vmem:[#allocation5 + $0x8] sm:$0xf]
    %v79 = vld [vmem:[#allocation5 + $0xc] sm:$0xf]
    %v82 = vunpack.c.l.b16 %v74
    %v83 = vunpack.c.l.b16 %v75
    %v84 = vpack.c.b16 %v83, %v82
    %v89 = vunpack.c.l.b16 %v76
    %v90 = vunpack.c.l.b16 %v77
    %v91 = vunpack.c.l.b16 %v78
    %v92 = vunpack.c.l.b16 %v79
    %v93 = vpack.c.b16 %v90, %v89
    %v94 = vpack.c.b16 %v92, %v91
    %vm97 = vcmask 261120
    %v99 = vsel %vm97, %v84, 0
    %101 = vmatprep.subr.bf16.mxu0 0
    %102 = vmatpush1.bf16.msra.mxu0 %v93
    %103 = vmatprep.subr.bf16.mxu0 0
    %104 = vmatpush1.bf16.msra.mxu0 %v94
    %105 = vmatprep.subr.bf16.mxu0 0
    %106 = vmatpush1.bf16.msra.mxu0 0
    %107 = vmatprep.subr.bf16.mxu0 0
    %108 = vmatpush1.bf16.msra.mxu0 0
    %109 = vmatprep.subr.bf16.mxu0 0
    %110 = vmatpush1.bf16.msra.mxu0 0
    %111 = vmatprep.subr.bf16.mxu0 0
    %112 = vmatpush1.bf16.msra.mxu0 0
    %113 = vmatprep.subr.bf16.mxu0 0
    %114 = vmatpush1.bf16.msra.mxu0 0
    %115 = vmatprep.subr.bf16.mxu0 0
    %116 = vmatpush1.bf16.msra.mxu0 0
    %117 = vmatprep.subr.bf16.mxu0 0
    %118 = vmatpush1.bf16.msra.mxu0 0
    %119 = vmatprep.subr.bf16.mxu0 0
    %120 = vmatpush1.bf16.msra.mxu0 0
    %121 = vmatprep.subr.bf16.mxu0 0
    %122 = vmatpush1.bf16.msra.mxu0 0
    %123 = vmatprep.subr.bf16.mxu0 0
    %124 = vmatpush1.bf16.msra.mxu0 0
    %125 = vmatprep.subr.bf16.mxu0 0
    %126 = vmatpush1.bf16.msra.mxu0 0
    %127 = vmatprep.subr.bf16.mxu0 0
    %128 = vmatpush1.bf16.msra.mxu0 0
    %129 = vmatprep.subr.bf16.mxu0 0
    %130 = vmatpush1.bf16.msra.mxu0 0
    %131 = vmatprep.subr.bf16.mxu0 0
    %132 = vmatpush1.bf16.msra.mxu0 0
    %133 = vmatprep.mubr.bf16.mxu0 0
    %134 = vmatmul.mubr.bf16.gmra.mrb[0].mxu0 %v99
    %v135 = vpop.f32.mrb[0].mxu0
    %v136 = vadd.f32 0.0, %v135
    %v137 = vpop.f32.mrb[0].mxu0
    %v138 = vpop.f32.mrb[0].mxu0
    %v139 = vadd.f32 0.0, %v138
    %v140 = vpop.f32.mrb[0].mxu0
    %141 = vdwg.mxu0
    %v142 = vld [vmem:[#allocation8] sm:$0xf]
    %v143 = vld [vmem:[#allocation8 + $0x4] sm:$0x1]
    %v144 = vlaneseq
    %v145 = vshrl.u32 %v144, 7
    %v146 = vadd.s32 %v145, 8
    %vm147 = vcmp.lt.s32.totalorder %v145, 0
    %v148 = vsub.s32 0, %v145
    %v149 = vsel %vm147, %v148, %v145
    %v150 = vshrl.u32 %v149, 3
    %v151 = vand.u32 %v149, 7
    %v152 = vsub.s32 0, %v151
    %v153 = vsel %vm147, %v152, %v151
    %vm154 = vcmp.lt.s32.totalorder %v146, 0
    %v155 = vsub.s32 0, %v146
    %v156 = vsel %vm154, %v155, %v146
    %v157 = vshrl.u32 %v156, 3
    %v158 = vand.u32 %v156, 7
    %v159 = vsub.s32 0, %v158
    %v160 = vsel %vm154, %v159, %v158
    %vm161 = vcmp.ne.s32.totalorder %v153, 0
    %vm162 = vcmp.ne.s32.totalorder %v160, 0
    %vm163 = vcmp.lt.s32.totalorder %v153, 0
    %vm164 = vcmp.lt.s32.totalorder %v160, 0
    %vm165 = vmand %vm163, %vm161
    %vm166 = vmand %vm164, %vm162
    %v167 = vadd.s32 %v153, 8
    %v168 = vadd.s32 %v160, 8
    %v169 = vsel %vm165, %v167, %v153
    %v170 = vsel %vm166, %v168, %v160
    %v171 = vlaneseq
    %v172 = vshrl.u32 %v171, 7
    %v173 = vsub.s32 3, %v172
    %v174 = vrot.slane %v142, %v173
    %v175 = vmul.f32 %v136, %v174
    %v176 = vmul.f32 %v139, %v174
    %v177 = vrot.slane %v136, 5
    %v178 = vrot.slane %v139, 5
    %vm179 = vcmp.lt.s32.totalorder %v145, 3
    %v180 = vsel %vm179, %v177, %v178
    %v181 = vsel %vm179, %v178, %v177
    %vm182 = vcmp.ge.s32.totalorder %v169, 3
    %vm183 = vcmp.ge.s32.totalorder %v170, 3
    %v184 = vsel %vm182, %v181, 0.0
    %v185 = vsel %vm183, %v180, 0.0
    %v186 = vlaneseq
    %v187 = vshrl.u32 %v186, 7
    %v188 = vsub.s32 0, %v187
    %v189 = vrot.slane %v142, %v188
    %v190 = vmul.f32 %v184, %v189
    %v191 = vmul.f32 %v185, %v189
    %v192 = vadd.f32 %v175, %v190
    %v193 = vadd.f32 %v176, %v191
    %v194 = vrot.slane %v136, 6
    %v195 = vrot.slane %v139, 6
    %vm196 = vcmp.lt.s32.totalorder %v145, 2
    %v197 = vsel %vm196, %v194, %v195
    %v198 = vsel %vm196, %v195, %v194
    %vm199 = vcmp.ge.s32.totalorder %v169, 2
    %vm200 = vcmp.ge.s32.totalorder %v170, 2
    %v201 = vsel %vm199, %v198, 0.0
    %v202 = vsel %vm200, %v197, 0.0
    %v203 = vlaneseq
    %v204 = vshrl.u32 %v203, 7
    %v205 = vsub.s32 1, %v204
    %v206 = vrot.slane %v142, %v205
    %v207 = vmul.f32 %v201, %v206
    %v208 = vmul.f32 %v202, %v206
    %v209 = vadd.f32 %v192, %v207
    %v210 = vadd.f32 %v193, %v208
    %v211 = vrot.slane %v136, 7
    %v212 = vrot.slane %v139, 7
    %vm213 = vcmp.lt.s32.totalorder %v145, 1
    %v214 = vsel %vm213, %v211, %v212
    %v215 = vsel %vm213, %v212, %v211
    %vm216 = vcmp.ge.s32.totalorder %v169, 1
    %vm217 = vcmp.ge.s32.totalorder %v170, 1
    %v218 = vsel %vm216, %v215, 0.0
    %v219 = vsel %vm217, %v214, 0.0
    %v220 = vlaneseq
    %v221 = vshrl.u32 %v220, 7
    %v222 = vsub.s32 2, %v221
    %v223 = vrot.slane %v142, %v222
    %v224 = vmul.f32 %v218, %v223
    %v225 = vmul.f32 %v219, %v223
    %v226 = vadd.f32 %v209, %v224
    %v227 = vadd.f32 %v210, %v225
    %v228 = vlaneseq
    %v229 = vshrl.u32 %v228, 7
    %v230 = vsub.s32 0, %v229
    %v231 = vrot.slane %v143, %v230
    %v232 = vadd.f32 %v226, %v231
    %v233 = vadd.f32 %v227, %v231
    %v234 = vxor.u32 %v232, 2147483648
    %v235 = vxor.u32 %v233, 2147483648
    %v236 = vmul.f32 %v234, 1.442695
    %v237 = vpow.pop %v236
    %v238 = vmul.f32 %v235, 1.442695
    %v239 = vpow.pop %v238
    %v240 = vadd.f32 %v237, 1.0
    %v241 = vadd.f32 %v239, 1.0
    %v242 = vrcp.pop %v240
    %v243 = vmul.f32 1.0, %v242
    %v244 = vrcp.pop %v241
    %v245 = vmul.f32 1.0, %v244
    %v246 = vmul.f32 %v232, %v243
    %v247 = vmul.f32 %v233, %v245
    %v248 = vld [vmem:[#allocation7] sm:$0xf]
    %v249 = vld [vmem:[#allocation7 + $0x4] sm:$0xf]
    %v250 = vld [vmem:[#allocation7 + $0x8] sm:$0xf]
    %v251 = vld [vmem:[#allocation7 + $0xc] sm:$0xf]
    %v252 = vld [vmem:[#allocation7 + $0x10] sm:$0xf]
    %v253 = vld [vmem:[#allocation7 + $0x14] sm:$0xf]
    %v254 = vld [vmem:[#allocation7 + $0x18] sm:$0xf]
    %v255 = vld [vmem:[#allocation7 + $0x1c] sm:$0xf]
    %v256 = vpack.c.bf16 %v247, %v246
    %v265 = vunpack.c.l.b16 %v248
    %v266 = vunpack.c.l.b16 %v249
    %v267 = vunpack.c.l.b16 %v250
    %v268 = vunpack.c.l.b16 %v251
    %v269 = vunpack.c.l.b16 %v252
    %v270 = vunpack.c.l.b16 %v253
    %v271 = vunpack.c.l.b16 %v254
    %v272 = vunpack.c.l.b16 %v255
    %v273 = vpack.c.b16 %v266, %v265
    %v274 = vpack.c.b16 %v268, %v267
    %v275 = vpack.c.b16 %v270, %v269
    %v276 = vpack.c.b16 %v272, %v271
    %vm281 = vcmask 523264
    %v283 = vsel %vm281, %v256, 0
    %285 = vmatprep.subr.bf16.mxu0 0
    %286 = vmatpush1.bf16.msra.mxu0 %v273
    %287 = vmatprep.subr.bf16.mxu0 0
    %288 = vmatpush1.bf16.msra.mxu0 %v274
    %289 = vmatprep.subr.bf16.mxu0 0
    %290 = vmatpush1.bf16.msra.mxu0 %v275
    %291 = vmatprep.subr.bf16.mxu0 0
    %292 = vmatpush1.bf16.msra.mxu0 %v276
    %293 = vmatprep.subr.bf16.mxu0 0
    %294 = vmatpush1.bf16.msra.mxu0 0
    %295 = vmatprep.subr.bf16.mxu0 0
    %296 = vmatpush1.bf16.msra.mxu0 0
    %297 = vmatprep.subr.bf16.mxu0 0
    %298 = vmatpush1.bf16.msra.mxu0 0
    %299 = vmatprep.subr.bf16.mxu0 0
    %300 = vmatpush1.bf16.msra.mxu0 0
    %301 = vmatprep.subr.bf16.mxu0 0
    %302 = vmatpush1.bf16.msra.mxu0 0
    %303 = vmatprep.subr.bf16.mxu0 0
    %304 = vmatpush1.bf16.msra.mxu0 0
    %305 = vmatprep.subr.bf16.mxu0 0
    %306 = vmatpush1.bf16.msra.mxu0 0
    %307 = vmatprep.subr.bf16.mxu0 0
    %308 = vmatpush1.bf16.msra.mxu0 0
    %309 = vmatprep.subr.bf16.mxu0 0
    %310 = vmatpush1.bf16.msra.mxu0 0
    %311 = vmatprep.subr.bf16.mxu0 0
    %312 = vmatpush1.bf16.msra.mxu0 0
    %313 = vmatprep.subr.bf16.mxu0 0
    %314 = vmatpush1.bf16.msra.mxu0 0
    %315 = vmatprep.subr.bf16.mxu0 0
    %316 = vmatpush1.bf16.msra.mxu0 0
    %317 = vmatprep.mubr.bf16.mxu0 0
    %318 = vmatmul.mubr.bf16.gmra.mrb[0].mxu0 %v283
    %v319 = vpop.f32.mrb[0].mxu0
    %v320 = vadd.f32 0.0, %v319
    %v321 = vpop.f32.mrb[0].mxu0
    %v322 = vpop.f32.mrb[0].mxu0
    %v323 = vadd.f32 0.0, %v322
    %v324 = vpop.f32.mrb[0].mxu0
    %325 = vdwg.mxu0
    %v326 = vld [vmem:[#allocation8 + $0x5] sm:$0x1]
    %v327 = vlaneseq
    %v328 = vshrl.u32 %v327, 7
    %v329 = vsub.s32 0, %v328
    %v330 = vrot.slane %v326, %v329
    %v331 = vadd.f32 %v320, %v330
    %v332 = vadd.f32 %v323, %v330
    %vm333 = vcmp.gt.f32.partialorder %v331, 20.0
    %vm334 = vcmp.gt.f32.partialorder %v332, 20.0
    %v335 = vmul.f32 %v331, 1.442695
    %v336 = vpow.pop %v335
    %v337 = vmul.f32 %v332, 1.442695
    %v338 = vpow.pop %v337
    %v339 = vadd.f32 %v336, 1.0
    %v340 = vlog2.pop %v339
    %v341 = vmul.f32 %v340, 0.6931472
    %v342 = vmul.f32 -0.5, %v336
    %v343 = vadd.f32 %v342, 1.0
    %v344 = vmul.f32 %v343, %v336
    %v345 = vand.u32 2147483647, %v336
    %vm346 = vcmp.lt.f32.partialorder %v345, 0.0004427343
    %v347 = vsel %vm346, %v344, %v341
    %v348 = vadd.f32 %v338, 1.0
    %v349 = vlog2.pop %v348
    %v350 = vmul.f32 %v349, 0.6931472
    %v351 = vmul.f32 -0.5, %v338
    %v352 = vadd.f32 %v351, 1.0
    %v353 = vmul.f32 %v352, %v338
    %v354 = vand.u32 2147483647, %v338
    %vm355 = vcmp.lt.f32.partialorder %v354, 0.0004427343
    %v356 = vsel %vm355, %v353, %v350
    %v357 = vsel %vm333, %v331, %v347
    %v358 = vsel %vm334, %v332, %v356
    %360 = vrot.lane.b32.xlu0 %v358, 64
    %v361 = vpop.permute.xlu0 %360
    %v363 = vsel %vm281, %v357, %v361
    %v364 = vmul.f32 %v357, %v246
    %v365 = vmul.f32 %v358, %v247
    %367 = vrot.lane.b32.xlu0 %v365, 64
    %v368 = vpop.permute.xlu0 %367
    %v370 = vsel %vm281, %v364, %v368
    %v371 = vld [vmem:[#allocation8 + $0x8] sm:$0xff]
    %v372 = vld [vmem:[#allocation8 + $0x10] sm:$0xff]
    %v373 = vmul.f32 %v371, 1.442695
    %v374 = vpow.pop %v373
    %v375 = vmul.f32 %v372, 1.442695
    %v376 = vpow.pop %v375
    %v377 = vsub.f32 0.0, %v374
    %v378 = vsub.f32 0.0, %v376
    %v380 = vcombine.high %v363, %v363
    %v382 = vunpack.c.l.s4 1966171168
    %v383 = vunpack.c.0.s8 %v382
    %v384 = vlaneseq
    %v385 = vshrl.u32 %v384, 7
    %v386 = vsub.s32 %v383, %v385
    %v387 = vrot.slane %v363, %v386
    %v389 = vunpack.c.l.s4 1966171168
    %v390 = vunpack.c.0.s8 %v389
    %v391 = vlaneseq
    %v392 = vshrl.u32 %v391, 7
    %v393 = vsub.s32 %v390, %v392
    %v394 = vrot.slane %v380, %v393
    %v395 = vcombine.high %v387, %v387
    %v396 = vcombine.high %v394, %v394
    %v398 = vunpack.c.l.s4 1966171168
    %v399 = vunpack.c.0.s8 %v398
    %v400 = vlaneseq
    %v401 = vshrl.u32 %v400, 7
    %v402 = vsub.s32 %v399, %v401
    %v403 = vrot.slane %v387, %v402
    %v405 = vunpack.c.l.s4 1966171168
    %v406 = vunpack.c.0.s8 %v405
    %v407 = vlaneseq
    %v408 = vshrl.u32 %v407, 7
    %v409 = vsub.s32 %v406, %v408
    %v410 = vrot.slane %v394, %v409
    %v412 = vunpack.c.l.s4 1966171168
    %v413 = vunpack.c.0.s8 %v412
    %v414 = vlaneseq
    %v415 = vshrl.u32 %v414, 7
    %v416 = vsub.s32 %v413, %v415
    %v417 = vrot.slane %v395, %v416
    %v419 = vunpack.c.l.s4 1966171168
    %v420 = vunpack.c.0.s8 %v419
    %v421 = vlaneseq
    %v422 = vshrl.u32 %v421, 7
    %v423 = vsub.s32 %v420, %v422
    %v424 = vrot.slane %v396, %v423
    %v425 = vcombine.high %v403, %v403
    %v426 = vcombine.high %v410, %v410
    %v427 = vcombine.high %v417, %v417
    %v428 = vcombine.high %v424, %v424
    %v429 = vlaneseq
    %v430 = vshrl.u32 %v429, 7
    %v431 = vsub.s32 0, %v430
    %v432 = vrot.slane %v403, %v431
    %v433 = vlaneseq
    %v434 = vshrl.u32 %v433, 7
    %v435 = vsub.s32 0, %v434
    %v436 = vrot.slane %v417, %v435
    %v437 = vlaneseq
    %v438 = vshrl.u32 %v437, 7
    %v439 = vsub.s32 0, %v438
    %v440 = vrot.slane %v425, %v439
    %v441 = vlaneseq
    %v442 = vshrl.u32 %v441, 7
    %v443 = vsub.s32 0, %v442
    %v444 = vrot.slane %v427, %v443
    %v445 = vlaneseq
    %v446 = vshrl.u32 %v445, 7
    %v447 = vsub.s32 0, %v446
    %v448 = vrot.slane %v410, %v447
    %v449 = vlaneseq
    %v450 = vshrl.u32 %v449, 7
    %v451 = vsub.s32 0, %v450
    %v452 = vrot.slane %v424, %v451
    %v453 = vlaneseq
    %v454 = vshrl.u32 %v453, 7
    %v455 = vsub.s32 0, %v454
    %v456 = vrot.slane %v426, %v455
    %v457 = vlaneseq
    %v458 = vshrl.u32 %v457, 7
    %v459 = vsub.s32 0, %v458
    %v460 = vrot.slane %v428, %v459
    %v469 = vmul.f32 %v432, %v377
    %v470 = vmul.f32 %v432, %v378
    %v471 = vmul.f32 %v436, %v377
    %v472 = vmul.f32 %v436, %v378
    %v473 = vmul.f32 %v440, %v377
    %v474 = vmul.f32 %v440, %v378
    %v475 = vmul.f32 %v444, %v377
    %v476 = vmul.f32 %v444, %v378
    %v477 = vmul.f32 %v448, %v377
    %v478 = vmul.f32 %v448, %v378
    %v479 = vmul.f32 %v452, %v377
    %v480 = vmul.f32 %v452, %v378
    %v481 = vmul.f32 %v456, %v377
    %v482 = vmul.f32 %v456, %v378
    %v483 = vmul.f32 %v460, %v377
    %v484 = vmul.f32 %v460, %v378
    %v485 = vmul.f32 %v469, 1.442695
    %v486 = vpow.pop %v485
    %v487 = vmul.f32 %v470, 1.442695
    %v488 = vpow.pop %v487
    %v489 = vmul.f32 %v471, 1.442695
    %v490 = vpow.pop %v489
    %v491 = vmul.f32 %v472, 1.442695
    %v492 = vpow.pop %v491
    %v493 = vmul.f32 %v473, 1.442695
    %v494 = vpow.pop %v493
    %v495 = vmul.f32 %v474, 1.442695
    %v496 = vpow.pop %v495
    %v497 = vmul.f32 %v475, 1.442695
    %v498 = vpow.pop %v497
    %v499 = vmul.f32 %v476, 1.442695
    %v500 = vpow.pop %v499
    %v501 = vmul.f32 %v477, 1.442695
    %v502 = vpow.pop %v501
    %v503 = vmul.f32 %v478, 1.442695
    %v504 = vpow.pop %v503
    %v505 = vmul.f32 %v479, 1.442695
    %v506 = vpow.pop %v505
    %v507 = vmul.f32 %v480, 1.442695
    %v508 = vpow.pop %v507
    %v509 = vmul.f32 %v481, 1.442695
    %v510 = vpow.pop %v509
    %v511 = vmul.f32 %v482, 1.442695
    %v512 = vpow.pop %v511
    %v513 = vmul.f32 %v483, 1.442695
    %v514 = vpow.pop %v513
    %v515 = vmul.f32 %v484, 1.442695
    %v516 = vpow.pop %v515
    %v517 = vlaneseq
    %v518 = vshrl.u32 %v517, 7
    %v519 = vsub.s32 0, %v518
    %v520 = vrot.slane %v320, %v519
    %s522 = sor.u32 256, 64
    %523 = vbcast.lane.b32.xlu0 %v520, %s522
    %v524 = vpop.permute.xlu0 %523
    %s526 = sor.u32 256, 72
    %527 = vbcast.lane.b32.xlu0 %v520, %s526
    %v528 = vpop.permute.xlu0 %527
    %v529 = vlaneseq
    %v530 = vshrl.u32 %v529, 7
    %v531 = vsub.s32 1, %v530
    %v532 = vrot.slane %v320, %v531
    %s534 = sor.u32 256, 64
    %535 = vbcast.lane.b32.xlu0 %v532, %s534
    %v536 = vpop.permute.xlu0 %535
    %s538 = sor.u32 256, 72
    %539 = vbcast.lane.b32.xlu0 %v532, %s538
    %v540 = vpop.permute.xlu0 %539
    %v541 = vlaneseq
    %v542 = vshrl.u32 %v541, 7
    %v543 = vsub.s32 2, %v542
    %v544 = vrot.slane %v320, %v543
    %s546 = sor.u32 256, 64
    %547 = vbcast.lane.b32.xlu0 %v544, %s546
    %v548 = vpop.permute.xlu0 %547
    %s550 = sor.u32 256, 72
    %551 = vbcast.lane.b32.xlu0 %v544, %s550
    %v552 = vpop.permute.xlu0 %551
    %v553 = vlaneseq
    %v554 = vshrl.u32 %v553, 7
    %v555 = vsub.s32 3, %v554
    %v556 = vrot.slane %v320, %v555
    %s558 = sor.u32 256, 64
    %559 = vbcast.lane.b32.xlu0 %v556, %s558
    %v560 = vpop.permute.xlu0 %559
    %s562 = sor.u32 256, 72
    %563 = vbcast.lane.b32.xlu0 %v556, %s562
    %v564 = vpop.permute.xlu0 %563
    %v565 = vlaneseq
    %v566 = vshrl.u32 %v565, 7
    %v567 = vsub.s32 4, %v566
    %v568 = vrot.slane %v320, %v567
    %s570 = sor.u32 256, 64
    %571 = vbcast.lane.b32.xlu0 %v568, %s570
    %v572 = vpop.permute.xlu0 %571
    %s574 = sor.u32 256, 72
    %575 = vbcast.lane.b32.xlu0 %v568, %s574
    %v576 = vpop.permute.xlu0 %575
    %v577 = vlaneseq
    %v578 = vshrl.u32 %v577, 7
    %v579 = vsub.s32 5, %v578
    %v580 = vrot.slane %v320, %v579
    %s582 = sor.u32 256, 64
    %583 = vbcast.lane.b32.xlu0 %v580, %s582
    %v584 = vpop.permute.xlu0 %583
    %s586 = sor.u32 256, 72
    %587 = vbcast.lane.b32.xlu0 %v580, %s586
    %v588 = vpop.permute.xlu0 %587
    %v589 = vlaneseq
    %v590 = vshrl.u32 %v589, 7
    %v591 = vsub.s32 6, %v590
    %v592 = vrot.slane %v320, %v591
    %s594 = sor.u32 256, 64
    %595 = vbcast.lane.b32.xlu0 %v592, %s594
    %v596 = vpop.permute.xlu0 %595
    %s598 = sor.u32 256, 72
    %599 = vbcast.lane.b32.xlu0 %v592, %s598
    %v600 = vpop.permute.xlu0 %599
    %v601 = vlaneseq
    %v602 = vshrl.u32 %v601, 7
    %v603 = vsub.s32 7, %v602
    %v604 = vrot.slane %v320, %v603
    %s606 = sor.u32 256, 64
    %607 = vbcast.lane.b32.xlu0 %v604, %s606
    %v608 = vpop.permute.xlu0 %607
    %s610 = sor.u32 256, 72
    %611 = vbcast.lane.b32.xlu0 %v604, %s610
    %v612 = vpop.permute.xlu0 %611
    %v613 = vlaneseq
    %v614 = vshrl.u32 %v613, 7
    %v615 = vsub.s32 0, %v614
    %v616 = vrot.slane %v323, %v615
    %s618 = sor.u32 256, 64
    %619 = vbcast.lane.b32.xlu0 %v616, %s618
    %v620 = vpop.permute.xlu0 %619
    %s622 = sor.u32 256, 72
    %623 = vbcast.lane.b32.xlu0 %v616, %s622
    %v624 = vpop.permute.xlu0 %623
    %v625 = vlaneseq
    %v626 = vshrl.u32 %v625, 7
    %v627 = vsub.s32 1, %v626
    %v628 = vrot.slane %v323, %v627
    %s630 = sor.u32 256, 64
    %631 = vbcast.lane.b32.xlu0 %v628, %s630
    %v632 = vpop.permute.xlu0 %631
    %s634 = sor.u32 256, 72
    %635 = vbcast.lane.b32.xlu0 %v628, %s634
    %v636 = vpop.permute.xlu0 %635
    %v637 = vlaneseq
    %v638 = vshrl.u32 %v637, 7
    %v639 = vsub.s32 2, %v638
    %v640 = vrot.slane %v323, %v639
    %s642 = sor.u32 256, 64
    %643 = vbcast.lane.b32.xlu0 %v640, %s642
    %v644 = vpop.permute.xlu0 %643
    %s646 = sor.u32 256, 72
    %647 = vbcast.lane.b32.xlu0 %v640, %s646
    %v648 = vpop.permute.xlu0 %647
    %v649 = vlaneseq
    %v650 = vshrl.u32 %v649, 7
    %v651 = vsub.s32 3, %v650
    %v652 = vrot.slane %v323, %v651
    %s654 = sor.u32 256, 64
    %655 = vbcast.lane.b32.xlu0 %v652, %s654
    %v656 = vpop.permute.xlu0 %655
    %s658 = sor.u32 256, 72
    %659 = vbcast.lane.b32.xlu0 %v652, %s658
    %v660 = vpop.permute.xlu0 %659
    %v661 = vlaneseq
    %v662 = vshrl.u32 %v661, 7
    %v663 = vsub.s32 4, %v662
    %v664 = vrot.slane %v323, %v663
    %s666 = sor.u32 256, 64
    %667 = vbcast.lane.b32.xlu0 %v664, %s666
    %v668 = vpop.permute.xlu0 %667
    %s670 = sor.u32 256, 72
    %671 = vbcast.lane.b32.xlu0 %v664, %s670
    %v672 = vpop.permute.xlu0 %671
    %v673 = vlaneseq
    %v674 = vshrl.u32 %v673, 7
    %v675 = vsub.s32 5, %v674
    %v676 = vrot.slane %v323, %v675
    %s678 = sor.u32 256, 64
    %679 = vbcast.lane.b32.xlu0 %v676, %s678
    %v680 = vpop.permute.xlu0 %679
    %s682 = sor.u32 256, 72
    %683 = vbcast.lane.b32.xlu0 %v676, %s682
    %v684 = vpop.permute.xlu0 %683
    %v685 = vlaneseq
    %v686 = vshrl.u32 %v685, 7
    %v687 = vsub.s32 6, %v686
    %v688 = vrot.slane %v323, %v687
    %s690 = sor.u32 256, 64
    %691 = vbcast.lane.b32.xlu0 %v688, %s690
    %v692 = vpop.permute.xlu0 %691
    %s694 = sor.u32 256, 72
    %695 = vbcast.lane.b32.xlu0 %v688, %s694
    %v696 = vpop.permute.xlu0 %695
    %v697 = vlaneseq
    %v698 = vshrl.u32 %v697, 7
    %v699 = vsub.s32 7, %v698
    %v700 = vrot.slane %v323, %v699
    %s702 = sor.u32 256, 64
    %703 = vbcast.lane.b32.xlu0 %v700, %s702
    %v704 = vpop.permute.xlu0 %703
    %s706 = sor.u32 256, 72
    %707 = vbcast.lane.b32.xlu0 %v700, %s706
    %v708 = vpop.permute.xlu0 %707
    %v709 = vsel %vm281, %v524, %v620
    %v710 = vsel %vm281, %v528, %v624
    %v711 = vsel %vm281, %v536, %v632
    %v712 = vsel %vm281, %v540, %v636
    %v713 = vsel %vm281, %v548, %v644
    %v714 = vsel %vm281, %v552, %v648
    %v715 = vsel %vm281, %v560, %v656
    %v716 = vsel %vm281, %v564, %v660
    %v717 = vsel %vm281, %v572, %v668
    %v718 = vsel %vm281, %v576, %v672
    %v719 = vsel %vm281, %v584, %v680
    %v720 = vsel %vm281, %v588, %v684
    %v721 = vsel %vm281, %v596, %v692
    %v722 = vsel %vm281, %v600, %v696
    %v723 = vsel %vm281, %v608, %v704
    %v724 = vsel %vm281, %v612, %v708
    %s726 = sor.u32 256, 80
    %727 = vbcast.lane.b32.xlu0 %v520, %s726
    %v728 = vpop.permute.xlu0 %727
    %s730 = sor.u32 256, 88
    %731 = vbcast.lane.b32.xlu0 %v520, %s730
    %v732 = vpop.permute.xlu0 %731
    %s734 = sor.u32 256, 80
    %735 = vbcast.lane.b32.xlu0 %v532, %s734
    %v736 = vpop.permute.xlu0 %735
    %s738 = sor.u32 256, 88
    %739 = vbcast.lane.b32.xlu0 %v532, %s738
    %v740 = vpop.permute.xlu0 %739
    %s742 = sor.u32 256, 80
    %743 = vbcast.lane.b32.xlu0 %v544, %s742
    %v744 = vpop.permute.xlu0 %743
    %s746 = sor.u32 256, 88
    %747 = vbcast.lane.b32.xlu0 %v544, %s746
    %v748 = vpop.permute.xlu0 %747
    %s750 = sor.u32 256, 80
    %751 = vbcast.lane.b32.xlu0 %v556, %s750
    %v752 = vpop.permute.xlu0 %751
    %s754 = sor.u32 256, 88
    %755 = vbcast.lane.b32.xlu0 %v556, %s754
    %v756 = vpop.permute.xlu0 %755
    %s758 = sor.u32 256, 80
    %759 = vbcast.lane.b32.xlu0 %v568, %s758
    %v760 = vpop.permute.xlu0 %759
    %s762 = sor.u32 256, 88
    %763 = vbcast.lane.b32.xlu0 %v568, %s762
    %v764 = vpop.permute.xlu0 %763
    %s766 = sor.u32 256, 80
    %767 = vbcast.lane.b32.xlu0 %v580, %s766
    %v768 = vpop.permute.xlu0 %767
    %s770 = sor.u32 256, 88
    %771 = vbcast.lane.b32.xlu0 %v580, %s770
    %v772 = vpop.permute.xlu0 %771
    %s774 = sor.u32 256, 80
    %775 = vbcast.lane.b32.xlu0 %v592, %s774
    %v776 = vpop.permute.xlu0 %775
    %s778 = sor.u32 256, 88
    %779 = vbcast.lane.b32.xlu0 %v592, %s778
    %v780 = vpop.permute.xlu0 %779
    %s782 = sor.u32 256, 80
    %783 = vbcast.lane.b32.xlu0 %v604, %s782
    %v784 = vpop.permute.xlu0 %783
    %s786 = sor.u32 256, 88
    %787 = vbcast.lane.b32.xlu0 %v604, %s786
    %v788 = vpop.permute.xlu0 %787
    %s790 = sor.u32 256, 80
    %791 = vbcast.lane.b32.xlu0 %v616, %s790
    %v792 = vpop.permute.xlu0 %791
    %s794 = sor.u32 256, 88
    %795 = vbcast.lane.b32.xlu0 %v616, %s794
    %v796 = vpop.permute.xlu0 %795
    %s798 = sor.u32 256, 80
    %799 = vbcast.lane.b32.xlu0 %v628, %s798
    %v800 = vpop.permute.xlu0 %799
    %s802 = sor.u32 256, 88
    %803 = vbcast.lane.b32.xlu0 %v628, %s802
    %v804 = vpop.permute.xlu0 %803
    %s806 = sor.u32 256, 80
    %807 = vbcast.lane.b32.xlu0 %v640, %s806
    %v808 = vpop.permute.xlu0 %807
    %s810 = sor.u32 256, 88
    %811 = vbcast.lane.b32.xlu0 %v640, %s810
    %v812 = vpop.permute.xlu0 %811
    %s814 = sor.u32 256, 80
    %815 = vbcast.lane.b32.xlu0 %v652, %s814
    %v816 = vpop.permute.xlu0 %815
    %s818 = sor.u32 256, 88
    %819 = vbcast.lane.b32.xlu0 %v652, %s818
    %v820 = vpop.permute.xlu0 %819
    %s822 = sor.u32 256, 80
    %823 = vbcast.lane.b32.xlu0 %v664, %s822
    %v824 = vpop.permute.xlu0 %823
    %s826 = sor.u32 256, 88
    %827 = vbcast.lane.b32.xlu0 %v664, %s826
    %v828 = vpop.permute.xlu0 %827
    %s830 = sor.u32 256, 80
    %831 = vbcast.lane.b32.xlu0 %v676, %s830
    %v832 = vpop.permute.xlu0 %831
    %s834 = sor.u32 256, 88
    %835 = vbcast.lane.b32.xlu0 %v676, %s834
    %v836 = vpop.permute.xlu0 %835
    %s838 = sor.u32 256, 80
    %839 = vbcast.lane.b32.xlu0 %v688, %s838
    %v840 = vpop.permute.xlu0 %839
    %s842 = sor.u32 256, 88
    %843 = vbcast.lane.b32.xlu0 %v688, %s842
    %v844 = vpop.permute.xlu0 %843
    %s846 = sor.u32 256, 80
    %847 = vbcast.lane.b32.xlu0 %v700, %s846
    %v848 = vpop.permute.xlu0 %847
    %s850 = sor.u32 256, 88
    %851 = vbcast.lane.b32.xlu0 %v700, %s850
    %v852 = vpop.permute.xlu0 %851
    %v853 = vsel %vm281, %v728, %v792
    %v854 = vsel %vm281, %v732, %v796
    %v855 = vsel %vm281, %v736, %v800
    %v856 = vsel %vm281, %v740, %v804
    %v857 = vsel %vm281, %v744, %v808
    %v858 = vsel %vm281, %v748, %v812
    %v859 = vsel %vm281, %v752, %v816
    %v860 = vsel %vm281, %v756, %v820
    %v861 = vsel %vm281, %v760, %v824
    %v862 = vsel %vm281, %v764, %v828
    %v863 = vsel %vm281, %v768, %v832
    %v864 = vsel %vm281, %v772, %v836
    %v865 = vsel %vm281, %v776, %v840
    %v866 = vsel %vm281, %v780, %v844
    %v867 = vsel %vm281, %v784, %v848
    %v868 = vsel %vm281, %v788, %v852
    %v870 = vcombine.high %v370, %v370
    %v872 = vunpack.c.l.s4 1966171168
    %v873 = vunpack.c.0.s8 %v872
    %v874 = vlaneseq
    %v875 = vshrl.u32 %v874, 7
    %v876 = vsub.s32 %v873, %v875
    %v877 = vrot.slane %v370, %v876
    %v879 = vunpack.c.l.s4 1966171168
    %v880 = vunpack.c.0.s8 %v879
    %v881 = vlaneseq
    %v882 = vshrl.u32 %v881, 7
    %v883 = vsub.s32 %v880, %v882
    %v884 = vrot.slane %v870, %v883
    %v885 = vcombine.high %v877, %v877
    %v886 = vcombine.high %v884, %v884
    %v888 = vunpack.c.l.s4 1966171168
    %v889 = vunpack.c.0.s8 %v888
    %v890 = vlaneseq
    %v891 = vshrl.u32 %v890, 7
    %v892 = vsub.s32 %v889, %v891
    %v893 = vrot.slane %v877, %v892
    %v895 = vunpack.c.l.s4 1966171168
    %v896 = vunpack.c.0.s8 %v895
    %v897 = vlaneseq
    %v898 = vshrl.u32 %v897, 7
    %v899 = vsub.s32 %v896, %v898
    %v900 = vrot.slane %v884, %v899
    %v902 = vunpack.c.l.s4 1966171168
    %v903 = vunpack.c.0.s8 %v902
    %v904 = vlaneseq
    %v905 = vshrl.u32 %v904, 7
    %v906 = vsub.s32 %v903, %v905
    %v907 = vrot.slane %v885, %v906
    %v909 = vunpack.c.l.s4 1966171168
    %v910 = vunpack.c.0.s8 %v909
    %v911 = vlaneseq
    %v912 = vshrl.u32 %v911, 7
    %v913 = vsub.s32 %v910, %v912
    %v914 = vrot.slane %v886, %v913
    %v915 = vcombine.high %v893, %v893
    %v916 = vcombine.high %v900, %v900
    %v917 = vcombine.high %v907, %v907
    %v918 = vcombine.high %v914, %v914
    %v919 = vlaneseq
    %v920 = vshrl.u32 %v919, 7
    %v921 = vsub.s32 0, %v920
    %v922 = vrot.slane %v893, %v921
    %v923 = vlaneseq
    %v924 = vshrl.u32 %v923, 7
    %v925 = vsub.s32 0, %v924
    %v926 = vrot.slane %v907, %v925
    %v927 = vlaneseq
    %v928 = vshrl.u32 %v927, 7
    %v929 = vsub.s32 0, %v928
    %v930 = vrot.slane %v915, %v929
    %v931 = vlaneseq
    %v932 = vshrl.u32 %v931, 7
    %v933 = vsub.s32 0, %v932
    %v934 = vrot.slane %v917, %v933
    %v935 = vlaneseq
    %v936 = vshrl.u32 %v935, 7
    %v937 = vsub.s32 0, %v936
    %v938 = vrot.slane %v900, %v937
    %v939 = vlaneseq
    %v940 = vshrl.u32 %v939, 7
    %v941 = vsub.s32 0, %v940
    %v942 = vrot.slane %v914, %v941
    %v943 = vlaneseq
    %v944 = vshrl.u32 %v943, 7
    %v945 = vsub.s32 0, %v944
    %v946 = vrot.slane %v916, %v945
    %v947 = vlaneseq
    %v948 = vshrl.u32 %v947, 7
    %v949 = vsub.s32 0, %v948
    %v950 = vrot.slane %v918, %v949
    %v959 = vmul.f32 %v922, %v709
    %v960 = vmul.f32 %v922, %v710
    %v961 = vmul.f32 %v926, %v711
    %v962 = vmul.f32 %v926, %v712
    %v963 = vmul.f32 %v930, %v713
    %v964 = vmul.f32 %v930, %v714
    %v965 = vmul.f32 %v934, %v715
    %v966 = vmul.f32 %v934, %v716
    %v967 = vmul.f32 %v938, %v717
    %v968 = vmul.f32 %v938, %v718
    %v969 = vmul.f32 %v942, %v719
    %v970 = vmul.f32 %v942, %v720
    %v971 = vmul.f32 %v946, %v721
    %v972 = vmul.f32 %v946, %v722
    %v973 = vmul.f32 %v950, %v723
    %v974 = vmul.f32 %v950, %v724
    %v975 = vmul.f32 %v486, 0.0
    %v976 = vmul.f32 %v488, 0.0
    %v977 = vadd.f32 %v975, %v959
    %v978 = vadd.f32 %v976, %v960
    %v979 = vmul.f32 %v853, %v977
    %v980 = vmul.f32 %v854, %v978
    %v981 = vadd.f32 %v979, %v980
    %v982 = vrot.slane %v981, 4
    %v983 = vadd.f32 %v981, %v982
    %v984 = vrot.slane %v983, 2
    %v985 = vadd.f32 %v983, %v984
    %v986 = vrot.slane %v985, 1
    %v987 = vadd.f32 %v985, %v986
    %v988 = vmul.f32 %v490, %v977
    %v989 = vmul.f32 %v492, %v978
    %v990 = vadd.f32 %v988, %v961
    %v991 = vadd.f32 %v989, %v962
    %v992 = vmul.f32 %v855, %v990
    %v993 = vmul.f32 %v856, %v991
    %v994 = vadd.f32 %v992, %v993
    %v995 = vrot.slane %v994, 4
    %v996 = vadd.f32 %v994, %v995
    %v997 = vrot.slane %v996, 2
    %v998 = vadd.f32 %v996, %v997
    %v999 = vrot.slane %v998, 1
    %v1000 = vadd.f32 %v998, %v999
    %v1001 = vmul.f32 %v494, %v990
    %v1002 = vmul.f32 %v496, %v991
    %v1003 = vadd.f32 %v1001, %v963
    %v1004 = vadd.f32 %v1002, %v964
    %v1005 = vmul.f32 %v857, %v1003
    %v1006 = vmul.f32 %v858, %v1004
    %v1007 = vadd.f32 %v1005, %v1006
    %v1008 = vrot.slane %v1007, 4
    %v1009 = vadd.f32 %v1007, %v1008
    %v1010 = vrot.slane %v1009, 2
    %v1011 = vadd.f32 %v1009, %v1010
    %v1012 = vrot.slane %v1011, 1
    %v1013 = vadd.f32 %v1011, %v1012
    %v1014 = vmul.f32 %v498, %v1003
    %v1015 = vmul.f32 %v500, %v1004
    %v1016 = vadd.f32 %v1014, %v965
    %v1017 = vadd.f32 %v1015, %v966
    %v1018 = vmul.f32 %v859, %v1016
    %v1019 = vmul.f32 %v860, %v1017
    %v1020 = vadd.f32 %v1018, %v1019
    %v1021 = vrot.slane %v1020, 4
    %v1022 = vadd.f32 %v1020, %v1021
    %v1023 = vrot.slane %v1022, 2
    %v1024 = vadd.f32 %v1022, %v1023
    %v1025 = vrot.slane %v1024, 1
    %v1026 = vadd.f32 %v1024, %v1025
    %v1027 = vmul.f32 %v502, %v1016
    %v1028 = vmul.f32 %v504, %v1017
    %v1029 = vadd.f32 %v1027, %v967
    %v1030 = vadd.f32 %v1028, %v968
    %v1031 = vmul.f32 %v861, %v1029
    %v1032 = vmul.f32 %v862, %v1030
    %v1033 = vadd.f32 %v1031, %v1032
    %v1034 = vrot.slane %v1033, 4
    %v1035 = vadd.f32 %v1033, %v1034
    %v1036 = vrot.slane %v1035, 2
    %v1037 = vadd.f32 %v1035, %v1036
    %v1038 = vrot.slane %v1037, 1
    %v1039 = vadd.f32 %v1037, %v1038
    %v1040 = vmul.f32 %v506, %v1029
    %v1041 = vmul.f32 %v508, %v1030
    %v1042 = vadd.f32 %v1040, %v969
    %v1043 = vadd.f32 %v1041, %v970
    %v1044 = vmul.f32 %v863, %v1042
    %v1045 = vmul.f32 %v864, %v1043
    %v1046 = vadd.f32 %v1044, %v1045
    %v1047 = vrot.slane %v1046, 4
    %v1048 = vadd.f32 %v1046, %v1047
    %v1049 = vrot.slane %v1048, 2
    %v1050 = vadd.f32 %v1048, %v1049
    %v1051 = vrot.slane %v1050, 1
    %v1052 = vadd.f32 %v1050, %v1051
    %v1053 = vmul.f32 %v510, %v1042
    %v1054 = vmul.f32 %v512, %v1043
    %v1055 = vadd.f32 %v1053, %v971
    %v1056 = vadd.f32 %v1054, %v972
    %v1057 = vmul.f32 %v865, %v1055
    %v1058 = vmul.f32 %v866, %v1056
    %v1059 = vadd.f32 %v1057, %v1058
    %v1060 = vrot.slane %v1059, 4
    %v1061 = vadd.f32 %v1059, %v1060
    %v1062 = vrot.slane %v1061, 2
    %v1063 = vadd.f32 %v1061, %v1062
    %v1064 = vrot.slane %v1063, 1
    %v1065 = vadd.f32 %v1063, %v1064
    %v1066 = vmul.f32 %v514, %v1055
    %v1067 = vmul.f32 %v516, %v1056
    %v1068 = vadd.f32 %v1066, %v973
    %v1069 = vadd.f32 %v1067, %v974
    %v1070 = vmul.f32 %v867, %v1068
    %v1071 = vmul.f32 %v868, %v1069
    %v1072 = vadd.f32 %v1070, %v1071
    %v1073 = vrot.slane %v1072, 4
    %v1074 = vadd.f32 %v1072, %v1073
    %v1075 = vrot.slane %v1074, 2
    %v1076 = vadd.f32 %v1074, %v1075
    %v1077 = vrot.slane %v1076, 1
    %v1078 = vadd.f32 %v1076, %v1077
    %vm1079 = vcmask 1040384
    %v1080 = vsel %vm1079, %v987, %v1000
    %vm1081 = vcmask 1041408
    %v1082 = vsel %vm1081, %v1080, %v1013
    %vm1083 = vcmask 1042432
    %v1084 = vsel %vm1083, %v1082, %v1026
    %vm1085 = vcmask 1043456
    %v1086 = vsel %vm1085, %v1084, %v1039
    %vm1087 = vcmask 1044480
    %v1088 = vsel %vm1087, %v1086, %v1052
    %vm1089 = vcmask 1045504
    %v1090 = vsel %vm1089, %v1088, %v1065
    %vm1091 = vcmask 1046528
    %v1092 = vsel %vm1091, %v1090, %v1078
    %1094 = vrot.lane.b32.xlu0 %v1092, 64
    %v1095 = vpop.permute.xlu0 %1094
    %v1097 = vld [vmem:[#allocation8 + $0x6] sm:$0x1]
    %v1098 = vlaneseq
    %v1099 = vshrl.u32 %v1098, 7
    %v1100 = vsub.s32 0, %v1099
    %v1101 = vrot.slane %v1097, %v1100
    %v1102 = vmul.f32 %v246, %v1101
    %v1103 = vmul.f32 %v247, %v1101
    %v1104 = vadd.f32 %v1092, %v1102
    %v1105 = vadd.f32 %v1095, %v1103
    %v1106 = vxor.u32 %v136, 2147483648
    %v1107 = vxor.u32 %v139, 2147483648
    %v1108 = vmul.f32 %v1106, 1.442695
    %v1109 = vpow.pop %v1108
    %v1110 = vmul.f32 %v1107, 1.442695
    %v1111 = vpow.pop %v1110
    %v1112 = vadd.f32 %v1109, 1.0
    %v1113 = vadd.f32 %v1111, 1.0
    %v1114 = vrcp.pop %v1112
    %v1115 = vmul.f32 1.0, %v1114
    %v1116 = vrcp.pop %v1113
    %v1117 = vmul.f32 1.0, %v1116
    %v1118 = vmul.f32 %v136, %v1115
    %v1119 = vmul.f32 %v139, %v1117
    %1122 = vrot.lane.b32.xlu0 %v1118, 64
    %v1123 = vpop.permute.xlu0 %1122
    %1124 = vrot.lane.b32.xlu0 %v1119, 64
    %v1125 = vpop.permute.xlu0 %1124
    %v1128 = vmul.f32 %v1104, %v1123
    %v1129 = vmul.f32 %v1105, %v1125
    %v1130 = vpack.c.bf16 %v1129, %v1128
    %v1132 = vsel %vm281, %v1130, 0
    %1134 = vmatprep.subr.bf16.mxu0 0
    %1135 = vmatpush1.bf16.msra.mxu0 %v273
    %1136 = vmatprep.subr.bf16.mxu0 0
    %1137 = vmatpush1.bf16.msra.mxu0 %v274
    %1138 = vmatprep.subr.bf16.mxu0 0
    %1139 = vmatpush1.bf16.msra.mxu0 %v275
    %1140 = vmatprep.subr.bf16.mxu0 0
    %1141 = vmatpush1.bf16.msra.mxu0 %v276
    %1142 = vmatprep.subr.bf16.mxu0 0
    %1143 = vmatpush1.bf16.msra.mxu0 0
    %1144 = vmatprep.subr.bf16.mxu0 0
    %1145 = vmatpush1.bf16.msra.mxu0 0
    %1146 = vmatprep.subr.bf16.mxu0 0
    %1147 = vmatpush1.bf16.msra.mxu0 0
    %1148 = vmatprep.subr.bf16.mxu0 0
    %1149 = vmatpush1.bf16.msra.mxu0 0
    %1150 = vmatprep.subr.bf16.mxu0 0
    %1151 = vmatpush1.bf16.msra.mxu0 0
    %1152 = vmatprep.subr.bf16.mxu0 0
    %1153 = vmatpush1.bf16.msra.mxu0 0
    %1154 = vmatprep.subr.bf16.mxu0 0
    %1155 = vmatpush1.bf16.msra.mxu0 0
    %1156 = vmatprep.subr.bf16.mxu0 0
    %1157 = vmatpush1.bf16.msra.mxu0 0
    %1158 = vmatprep.subr.bf16.mxu0 0
    %1159 = vmatpush1.bf16.msra.mxu0 0
    %1160 = vmatprep.subr.bf16.mxu0 0
    %1161 = vmatpush1.bf16.msra.mxu0 0
    %1162 = vmatprep.subr.bf16.mxu0 0
    %1163 = vmatpush1.bf16.msra.mxu0 0
    %1164 = vmatprep.subr.bf16.mxu0 0
    %1165 = vmatpush1.bf16.msra.mxu0 0
    %1166 = vmatprep.mubr.bf16.mxu0 0
    %1167 = vmatmul.mubr.bf16.gmra.mrb[0].mxu0 %v1132
    %v1168 = vpop.f32.mrb[0].mxu0
    %v1169 = vadd.f32 0.0, %v1168
    %v1170 = vpop.f32.mrb[0].mxu0
    %v1171 = vpop.f32.mrb[0].mxu0
    %v1172 = vadd.f32 0.0, %v1171
    %v1173 = vpop.f32.mrb[0].mxu0
    %1174 = vdwg.mxu0
    %1177 = vrot.lane.b32.xlu0 %v1169, 32
    %v1178 = vpop.permute.xlu0 %1177
    %1179 = vrot.lane.b32.xlu0 %v1172, 32
    %v1180 = vpop.permute.xlu0 %1179
    %1183 = vst.msk [vmem:[#allocation10] sm:$0xff] %vm97, %v1178
    %1184 = vst.msk [vmem:[#allocation10 + $0x8] sm:$0xff] %vm97, %v1180
    // Predicated region
    $region34: #{tpu_custom_call.1} parent=1 // pred_check
      _
    $region35: #{tpu_custom_call.1} parent=1 // pred_check_branch
      %1186 = sbr.rel (0) target = $region37
    $region36: #{tpu_custom_call.1} parent=1 // pred_region
      %s1188 = ssub.s32 256, 256
      %1189 = vsyncadd [#allocation4], %s1188
      %s1190 = sshll.u32 [#allocation10], 4
      %s1191 = int_to_ptr.vmem [resolvable:$true] %s1190
      %1196 = dma.vmem_to_hbm [thread:$0]  %s1191, 256, %s4, [#allocation4], 128, 128, 8
    $region37: #{tpu_custom_call.1} parent=1 // pred_fallthru
      _
    // Predicated region
    $region38: #{tpu_custom_call.1} parent=1 // pred_check
      _
    $region39: #{tpu_custom_call.1} parent=1 // pred_check_branch
      %1198 = sbr.rel (0) target = $region41
    $region40: #{tpu_custom_call.1} parent=1 // pred_region
      %1199 = dma.done [#allocation4], 256
    $region41: #{tpu_custom_call.1} parent=1 // pred_fallthru
      _
    %1200 = vsyncpa [#allocation3], 1
    %1201 = vsyncpa [#allocation6], 1
    %1202 = vsyncpa [#allocation9], 1
    %1203 = vsyncpa [#allocation4], 1

</llo_original>
